<compile_context>
chip_gen: v5e
topology: v5e:2x2
jax: 0.10.0
libtpu: 0.0.40
codegen_flags: <defaults>
</compile_context>

<pallas_src>
import functools

import jax
import jax.numpy as jnp
from jax import lax
from jax.experimental import pallas as pl
from jax.experimental.pallas import tpu as pltpu

EPS = 1e-5  # PyTorch BatchNorm2d default eps


def _round_up(n, m):
    return (n + m - 1) // m * m


def _dense_block_kernel(*refs, layer_specs, out_slabs, C0, W, matmul_dtype):
    """Fused DenseBlock: per layer BN(batch stats) -> ReLU -> Conv2d(3x3,pad=1),
    appending the new channels to the VMEM-resident activation buffer.

    refs = (x, masks, [gamma, beta, w, bias] * L, out, act_scratch)
      x      : (C0, NP)            input channels, flattened N*H*W on lanes
      masks  : (9, NP)             precomputed 3x3 boundary masks (lane-only)
      gamma/beta : (cin_pad, 1)    BN affine params, scattered to padded rows
      w      : (9, Cout_pad, cin_pad)  per-tap weights (zero on padded rows/cols)
      bias   : (Cout_pad, 1)
      out    : (C_total, NP)       dense channel concatenation
      act    : (C_pad_total, NP)   padded activation scratch (f32)
    """
    n_layers = len(layer_specs)
    x_ref, masks_ref = refs[0], refs[1]
    param_refs = refs[2:2 + 4 * n_layers]
    out_ref = refs[2 + 4 * n_layers]
    act_ref = refs[3 + 4 * n_layers]
    NP = act_ref.shape[-1]

    # Zero the padded activation buffer once, then drop in the input slab.
    act_ref[...] = jnp.zeros_like(act_ref)
    act_ref[0:C0, :] = x_ref[...]

    masks = masks_ref[...]                                   # (9, NP) f32

    for li, (cin_p, cout_p, woff) in enumerate(layer_specs):
        g_ref, beta_ref, w_ref, bias_ref = param_refs[4 * li:4 * li + 4]

        x = act_ref[0:cin_p, :]                              # (cin_p, NP) f32
        # BatchNorm2d training-mode (biased) stats, single pass over x (f32).
        mean = jnp.mean(x, axis=1, keepdims=True)            # (cin_p, 1)
        ex2 = jnp.mean(x * x, axis=1, keepdims=True)
        var = jnp.maximum(ex2 - mean * mean, 0.0)
        scale = g_ref[...] * lax.rsqrt(var + EPS)            # rsqrt -> EUP slot
        shift = beta_ref[...] - mean * scale
        a = jnp.maximum(x * scale + shift, 0.0)              # BN + ReLU (f32)

        # 3x3 conv: 9 lane-rolled taps (XLU), each masked at the image
        # boundary and fed straight into an accumulating MXU matmul.
        acc = None
        for k in range(9):
            dy, dx = k // 3 - 1, k % 3 - 1
            s = dy * W + dx
            if s == 0:
                tap = a
            else:
                tap = pltpu.roll(a, shift=(-s) % NP, axis=1) * masks[k:k + 1, :]
            d = jnp.dot(w_ref[k], tap.astype(matmul_dtype),
                        preferred_element_type=jnp.float32)
            acc = d if acc is None else acc + d
        y = acc + bias_ref[...]                              # (cout_p, NP) f32

        # Append the new channels: tile-aligned (multiple-of-8) slab write.
        act_ref[woff:woff + cout_p, :] = y

    # Assemble the dense (un-padded) channel concatenation once at the end.
    for dst, src, length in out_slabs:
        out_ref[dst:dst + length, :] = act_ref[src:src + length, :]


def init_dense_block(key, num_convs, in_channels, out_channels):
    """Deterministic parameter init matching DenseBlock.__init__ shapes."""
    params = []
    for i in range(num_convs):
        in_c = in_channels + i * out_channels
        key, k1, k2 = jax.random.split(key, 3)
        gamma = jnp.ones((in_c,), jnp.float32)          # BN weight
        beta = jnp.zeros((in_c,), jnp.float32)          # BN bias
        w = 0.1 * jax.random.normal(k1, (3, 3, in_c, out_channels), jnp.float32)
        b = 0.1 * jax.random.normal(k2, (out_channels,), jnp.float32)
        params.append((gamma, beta, w, b))
    return params


def dense_block_forward(x_nchw, params, matmul_dtype=jnp.bfloat16):
    """DenseBlock.forward fused into a single Pallas kernel."""
    x = x_nchw.astype(jnp.float32)
    N, C0, H, W = x.shape
    NP = N * H * W
    assert NP % 128 == 0, "lane axis (N*H*W) must be a multiple of 128"
    L = len(params)
    Cout = params[0][3].shape[0]
    C_total = C0 + L * Cout

    SUB = 8                                   # f32 sublane tile
    C0_pad = _round_up(C0, SUB)
    Cout_pad = _round_up(Cout, SUB)
    C_pad_total = C0_pad + L * Cout_pad

    # (real_start, padded_start, length) channel slabs for input + first n layers.
    def slabs(n):
        out = [(0, 0, C0)]
        for j in range(n):
            out.append((C0 + j * Cout, C0_pad + j * Cout_pad, Cout))
        return out

    # Precomputed 3x3 boundary masks: lane-index only, shared by all layers.
    p = jnp.arange(NP, dtype=jnp.int32)
    xc = p % W
    yr = (p // W) % H
    mask_rows = []
    for k in range(9):
        dy, dx = k // 3 - 1, k % 3 - 1
        valid = ((yr + dy >= 0) & (yr + dy <= H - 1) &
                 (xc + dx >= 0) & (xc + dx <= W - 1))
        mask_rows.append(valid.astype(jnp.float32))
    masks = jnp.stack(mask_rows)                             # (9, NP)

    inputs = [jnp.transpose(x, (1, 0, 2, 3)).reshape(C0, NP), masks]
    layer_specs = []
    cin = C0
    for li, (gamma, beta, w, b) in enumerate(params):
        cin_p = C0_pad + li * Cout_pad        # padded input rows for this layer
        # Scatter BN params and weight columns into padded channel rows
        # (padded rows/cols stay zero, so they never contribute to the conv).
        g_pad = jnp.zeros((cin_p, 1), jnp.float32)
        beta_pad = jnp.zeros((cin_p, 1), jnp.float32)
        # w: (3,3,cin,Cout) HWIO; w_taps[k] = w[ky,kx].T -> (Cout, cin).
        w_taps = jnp.transpose(w.reshape(9, cin, Cout), (0, 2, 1))
        w_pad = jnp.zeros((9, Cout_pad, cin_p), jnp.float32)
        for rstart, pstart, length in slabs(li):
            g_pad = g_pad.at[pstart:pstart + length, 0].set(
                gamma[rstart:rstart + length])
            beta_pad = beta_pad.at[pstart:pstart + length, 0].set(
                beta[rstart:rstart + length])
            w_pad = w_pad.at[:, :Cout, pstart:pstart + length].set(
                w_taps[:, :, rstart:rstart + length])
        b_pad = jnp.zeros((Cout_pad, 1), jnp.float32).at[0:Cout, 0].set(b)
        inputs += [g_pad, beta_pad, w_pad.astype(matmul_dtype), b_pad]
        layer_specs.append((cin_p, Cout_pad, C0_pad + li * Cout_pad))
        cin += Cout

    kernel = functools.partial(
        _dense_block_kernel,
        layer_specs=tuple(layer_specs), out_slabs=tuple(slabs(L)),
        C0=C0, W=W, matmul_dtype=matmul_dtype)

    flops = sum(2 * cout_p * 9 * cin_p * NP for (cin_p, cout_p, _) in layer_specs)
    buf = pl.pallas_call(
        kernel,
        out_shape=jax.ShapeDtypeStruct((C_total, NP), jnp.float32),
        in_specs=[pl.BlockSpec(memory_space=pltpu.MemorySpace.VMEM)] * len(inputs),
        out_specs=pl.BlockSpec(memory_space=pltpu.MemorySpace.VMEM),
        scratch_shapes=[pltpu.VMEM((C_pad_total, NP), jnp.float32)],
        cost_estimate=pl.CostEstimate(
            flops=flops,
            transcendentals=sum(cp for (cp, _, _) in layer_specs),
            bytes_accessed=4 * (C0 + C_total) * NP),
    )(*inputs)

    return jnp.transpose(buf.reshape(C_total, N, H, W), (1, 0, 2, 3))


def dense_block_ref(x_nchw, params):
    """Pure-JAX reference for verification."""
    x = jnp.transpose(x_nchw, (0, 2, 3, 1)).astype(jnp.float32)
    for gamma, beta, w, b in params:
        mean = jnp.mean(x, axis=(0, 1, 2))
        var = jnp.mean((x - mean) ** 2, axis=(0, 1, 2))
        a = jnp.maximum((x - mean) / jnp.sqrt(var + EPS) * gamma + beta, 0.0)
        y = jax.lax.conv_general_dilated(
            a, w, window_strides=(1, 1), padding="SAME",
            dimension_numbers=("NHWC", "HWIO", "NHWC"),
            precision=jax.lax.Precision.HIGHEST) + b
        x = jnp.concatenate([x, y], axis=-1)
    return jnp.transpose(x, (0, 3, 1, 2))


if __name__ == "__main__":
    key = jax.random.PRNGKey(0)
    key, xkey = jax.random.split(key)

    # Small shapes consistent with the module: N=2, C=4, H=W=16 (NCHW input),
    # DenseBlock(num_convs=2, in_channels=4, out_channels=8) -> 20 out channels.
    num_convs, in_channels, out_channels = 2, 4, 8
    x = jax.random.uniform(xkey, (2, in_channels, 16, 16), jnp.float32)
    params = init_dense_block(key, num_convs, in_channels, out_channels)
    expected_channels = in_channels + num_convs * out_channels

    ref = jax.block_until_ready(dense_block_ref(x, params))

    # f32-at-the-MXU path: tight check against the HIGHEST-precision reference.
    fwd_f32 = jax.jit(functools.partial(dense_block_forward,
                                        matmul_dtype=jnp.float32))
    out_f32 = jax.block_until_ready(fwd_f32(x, params))
    assert out_f32.shape == (2, expected_channels, 16, 16), out_f32.shape
    assert bool(jnp.allclose(out_f32, ref, atol=1e-3, rtol=1e-3)), (
        float(jnp.max(jnp.abs(out_f32 - ref))))

    # bf16-at-the-MXU path (native MXU path on v6e/v7x): looser tolerance.
    fwd_bf16 = jax.jit(functools.partial(dense_block_forward,
                                         matmul_dtype=jnp.bfloat16))
    out_bf16 = jax.block_until_ready(fwd_bf16(x, params))
    assert out_bf16.shape == (2, expected_channels, 16, 16), out_bf16.shape
    assert bool(jnp.allclose(out_bf16, ref, atol=5e-2, rtol=5e-2)), (
        float(jnp.max(jnp.abs(out_bf16 - ref))))

    print("KERNEL_OK")
</pallas_src>

<mosaic_0001>
module attributes {stable_mosaic.version = 11 : i64} {
  func.func @_dense_block_kernel(%arg0: memref<4x512xf32, #tpu.memory_space<vmem>>, %arg1: memref<9x512xf32, #tpu.memory_space<vmem>>, %arg2: memref<8x1xf32, #tpu.memory_space<vmem>>, %arg3: memref<8x1xf32, #tpu.memory_space<vmem>>, %arg4: memref<9x8x8xf32, #tpu.memory_space<vmem>>, %arg5: memref<8x1xf32, #tpu.memory_space<vmem>>, %arg6: memref<16x1xf32, #tpu.memory_space<vmem>>, %arg7: memref<16x1xf32, #tpu.memory_space<vmem>>, %arg8: memref<9x8x16xf32, #tpu.memory_space<vmem>>, %arg9: memref<8x1xf32, #tpu.memory_space<vmem>>, %arg10: memref<20x512xf32, #tpu.memory_space<vmem>>, %arg11: memref<24x512xf32, #tpu.memory_space<vmem>>) attributes {dimension_semantics = [], scalar_prefetch = 0 : i64, scratch_operands = 1 : i64, tpu.core_type = #tpu.core_type<tc>} {
    %cst = arith.constant 0.000000e+00 : f32
    %0 = vector.broadcast %cst : f32 to vector<24x512xf32>
    %c0 = arith.constant 0 : index
    %c0_0 = arith.constant 0 : index
    %1 = vector.load %arg11[%c0, %c0_0] : memref<24x512xf32, #tpu.memory_space<vmem>>, vector<24x512xf32>
    tpu.vector_store %arg11[%c0, %c0_0], %0 {strides = array<i32>} : memref<24x512xf32, #tpu.memory_space<vmem>>, vector<24x512xf32>,
    %c0_1 = arith.constant 0 : index
    %c0_2 = arith.constant 0 : index
    %2 = vector.load %arg0[%c0_1, %c0_2] : memref<4x512xf32, #tpu.memory_space<vmem>>, vector<4x512xf32>
    %c0_3 = arith.constant 0 : index
    %c0_4 = arith.constant 0 : index
    %3 = vector.load %arg11[%c0_3, %c0_4] : memref<24x512xf32, #tpu.memory_space<vmem>>, vector<4x512xf32>
    tpu.vector_store %arg11[%c0_3, %c0_4], %2 {strides = array<i32>} : memref<24x512xf32, #tpu.memory_space<vmem>>, vector<4x512xf32>,
    %c0_5 = arith.constant 0 : index
    %c0_6 = arith.constant 0 : index
    %4 = vector.load %arg1[%c0_5, %c0_6] : memref<9x512xf32, #tpu.memory_space<vmem>>, vector<9x512xf32>
    %c0_7 = arith.constant 0 : index
    %c0_8 = arith.constant 0 : index
    %5 = vector.load %arg11[%c0_7, %c0_8] : memref<24x512xf32, #tpu.memory_space<vmem>>, vector<8x512xf32>
    %cst_9 = arith.constant dense<0.000000e+00> : vector<8xf32>
    %6 = vector.multi_reduction <add>, %5, %cst_9 [1] : vector<8x512xf32> to vector<8xf32>
    %7 = vector.shape_cast %6 : vector<8xf32> to vector<8x1xf32>
    %cst_10 = arith.constant 5.120000e+02 : f32
    %8 = vector.broadcast %cst_10 : f32 to vector<8x1xf32>
    %9 = arith.divf %7, %8 : vector<8x1xf32>
    %10 = arith.mulf %5, %5 : vector<8x512xf32>
    %cst_11 = arith.constant dense<0.000000e+00> : vector<8xf32>
    %11 = vector.multi_reduction <add>, %10, %cst_11 [1] : vector<8x512xf32> to vector<8xf32>
    %12 = vector.shape_cast %11 : vector<8xf32> to vector<8x1xf32>
    %cst_12 = arith.constant 5.120000e+02 : f32
    %13 = vector.broadcast %cst_12 : f32 to vector<8x1xf32>
    %14 = arith.divf %12, %13 : vector<8x1xf32>
    %15 = arith.mulf %9, %9 : vector<8x1xf32>
    %16 = arith.subf %14, %15 : vector<8x1xf32>
    %cst_13 = arith.constant 0.000000e+00 : f32
    %17 = vector.broadcast %cst_13 : f32 to vector<8x1xf32>
    %18 = arith.maximumf %16, %17 : vector<8x1xf32>
    %c0_14 = arith.constant 0 : index
    %c0_15 = arith.constant 0 : index
    %19 = vector.load %arg2[%c0_14, %c0_15] : memref<8x1xf32, #tpu.memory_space<vmem>>, vector<8x1xf32>
    %cst_16 = arith.constant 9.99999974E-6 : f32
    %20 = vector.broadcast %cst_16 : f32 to vector<8x1xf32>
    %21 = arith.addf %18, %20 : vector<8x1xf32>
    %22 = math.rsqrt %21 : vector<8x1xf32>
    %23 = arith.mulf %19, %22 : vector<8x1xf32>
    %c0_17 = arith.constant 0 : index
    %c0_18 = arith.constant 0 : index
    %24 = vector.load %arg3[%c0_17, %c0_18] : memref<8x1xf32, #tpu.memory_space<vmem>>, vector<8x1xf32>
    %25 = arith.mulf %9, %23 : vector<8x1xf32>
    %26 = arith.subf %24, %25 : vector<8x1xf32>
    %27 = vector.broadcast %23 : vector<8x1xf32> to vector<8x512xf32>
    %28 = arith.mulf %5, %27 : vector<8x512xf32>
    %29 = vector.broadcast %26 : vector<8x1xf32> to vector<8x512xf32>
    %30 = arith.addf %28, %29 : vector<8x512xf32>
    %cst_19 = arith.constant 0.000000e+00 : f32
    %31 = vector.broadcast %cst_19 : f32 to vector<8x512xf32>
    %32 = arith.maximumf %30, %31 : vector<8x512xf32>
    %c17_i32 = arith.constant 17 : i32
    %33 = tpu.dynamic_rotate %32 by %c17_i32 dim 1 : vector<8x512xf32>, i32 -> vector<8x512xf32>
    %34 = vector.extract_strided_slice %4 {offsets = [0, 0], sizes = [1, 512], strides = [1, 1]} : vector<9x512xf32> to vector<1x512xf32>
    %35 = vector.broadcast %34 : vector<1x512xf32> to vector<8x512xf32>
    %36 = arith.mulf %33, %35 : vector<8x512xf32>
    %c0_20 = arith.constant 0 : index
    %c0_21 = arith.constant 0 : index
    %c0_22 = arith.constant 0 : index
    %37 = vector.load %arg4[%c0_20, %c0_21, %c0_22] : memref<9x8x8xf32, #tpu.memory_space<vmem>>, vector<1x8x8xf32>
    %38 = vector.shape_cast %37 : vector<1x8x8xf32> to vector<8x8xf32>
    %cst_23 = arith.constant dense<0.000000e+00> : vector<8x512xf32>
    %39 = tpu.matmul %38, %36, %cst_23 {dimension_numbers = #tpu.dot_dimension_numbers<[1], [0], [0], [1], [0, 0, 1, 1], [], []>} : vector<8x8xf32>, vector<8x512xf32>, vector<8x512xf32> -> vector<8x512xf32>
    %c16_i32 = arith.constant 16 : i32
    %40 = tpu.dynamic_rotate %32 by %c16_i32 dim 1 : vector<8x512xf32>, i32 -> vector<8x512xf32>
    %41 = vector.extract_strided_slice %4 {offsets = [1, 0], sizes = [1, 512], strides = [1, 1]} : vector<9x512xf32> to vector<1x512xf32>
    %42 = vector.broadcast %41 : vector<1x512xf32> to vector<8x512xf32>
    %43 = arith.mulf %40, %42 : vector<8x512xf32>
    %c1 = arith.constant 1 : index
    %c0_24 = arith.constant 0 : index
    %c0_25 = arith.constant 0 : index
    %44 = vector.load %arg4[%c1, %c0_24, %c0_25] : memref<9x8x8xf32, #tpu.memory_space<vmem>>, vector<1x8x8xf32>
    %45 = vector.shape_cast %44 : vector<1x8x8xf32> to vector<8x8xf32>
    %cst_26 = arith.constant dense<0.000000e+00> : vector<8x512xf32>
    %46 = tpu.matmul %45, %43, %cst_26 {dimension_numbers = #tpu.dot_dimension_numbers<[1], [0], [0], [1], [0, 0, 1, 1], [], []>} : vector<8x8xf32>, vector<8x512xf32>, vector<8x512xf32> -> vector<8x512xf32>
    %47 = arith.addf %39, %46 : vector<8x512xf32>
    %c15_i32 = arith.constant 15 : i32
    %48 = tpu.dynamic_rotate %32 by %c15_i32 dim 1 : vector<8x512xf32>, i32 -> vector<8x512xf32>
    %49 = vector.extract_strided_slice %4 {offsets = [2, 0], sizes = [1, 512], strides = [1, 1]} : vector<9x512xf32> to vector<1x512xf32>
    %50 = vector.broadcast %49 : vector<1x512xf32> to vector<8x512xf32>
    %51 = arith.mulf %48, %50 : vector<8x512xf32>
    %c2 = arith.constant 2 : index
    %c0_27 = arith.constant 0 : index
    %c0_28 = arith.constant 0 : index
    %52 = vector.load %arg4[%c2, %c0_27, %c0_28] : memref<9x8x8xf32, #tpu.memory_space<vmem>>, vector<1x8x8xf32>
    %53 = vector.shape_cast %52 : vector<1x8x8xf32> to vector<8x8xf32>
    %cst_29 = arith.constant dense<0.000000e+00> : vector<8x512xf32>
    %54 = tpu.matmul %53, %51, %cst_29 {dimension_numbers = #tpu.dot_dimension_numbers<[1], [0], [0], [1], [0, 0, 1, 1], [], []>} : vector<8x8xf32>, vector<8x512xf32>, vector<8x512xf32> -> vector<8x512xf32>
    %55 = arith.addf %47, %54 : vector<8x512xf32>
    %c1_i32 = arith.constant 1 : i32
    %56 = tpu.dynamic_rotate %32 by %c1_i32 dim 1 : vector<8x512xf32>, i32 -> vector<8x512xf32>
    %57 = vector.extract_strided_slice %4 {offsets = [3, 0], sizes = [1, 512], strides = [1, 1]} : vector<9x512xf32> to vector<1x512xf32>
    %58 = vector.broadcast %57 : vector<1x512xf32> to vector<8x512xf32>
    %59 = arith.mulf %56, %58 : vector<8x512xf32>
    %c3 = arith.constant 3 : index
    %c0_30 = arith.constant 0 : index
    %c0_31 = arith.constant 0 : index
    %60 = vector.load %arg4[%c3, %c0_30, %c0_31] : memref<9x8x8xf32, #tpu.memory_space<vmem>>, vector<1x8x8xf32>
    %61 = vector.shape_cast %60 : vector<1x8x8xf32> to vector<8x8xf32>
    %cst_32 = arith.constant dense<0.000000e+00> : vector<8x512xf32>
    %62 = tpu.matmul %61, %59, %cst_32 {dimension_numbers = #tpu.dot_dimension_numbers<[1], [0], [0], [1], [0, 0, 1, 1], [], []>} : vector<8x8xf32>, vector<8x512xf32>, vector<8x512xf32> -> vector<8x512xf32>
    %63 = arith.addf %55, %62 : vector<8x512xf32>
    %c4 = arith.constant 4 : index
    %c0_33 = arith.constant 0 : index
    %c0_34 = arith.constant 0 : index
    %64 = vector.load %arg4[%c4, %c0_33, %c0_34] : memref<9x8x8xf32, #tpu.memory_space<vmem>>, vector<1x8x8xf32>
    %65 = vector.shape_cast %64 : vector<1x8x8xf32> to vector<8x8xf32>
    %cst_35 = arith.constant dense<0.000000e+00> : vector<8x512xf32>
    %66 = tpu.matmul %65, %32, %cst_35 {dimension_numbers = #tpu.dot_dimension_numbers<[1], [0], [0], [1], [0, 0, 1, 1], [], []>} : vector<8x8xf32>, vector<8x512xf32>, vector<8x512xf32> -> vector<8x512xf32>
    %67 = arith.addf %63, %66 : vector<8x512xf32>
    %c511_i32 = arith.constant 511 : i32
    %68 = tpu.dynamic_rotate %32 by %c511_i32 dim 1 : vector<8x512xf32>, i32 -> vector<8x512xf32>
    %69 = vector.extract_strided_slice %4 {offsets = [5, 0], sizes = [1, 512], strides = [1, 1]} : vector<9x512xf32> to vector<1x512xf32>
    %70 = vector.broadcast %69 : vector<1x512xf32> to vector<8x512xf32>
    %71 = arith.mulf %68, %70 : vector<8x512xf32>
    %c5 = arith.constant 5 : index
    %c0_36 = arith.constant 0 : index
    %c0_37 = arith.constant 0 : index
    %72 = vector.load %arg4[%c5, %c0_36, %c0_37] : memref<9x8x8xf32, #tpu.memory_space<vmem>>, vector<1x8x8xf32>
    %73 = vector.shape_cast %72 : vector<1x8x8xf32> to vector<8x8xf32>
    %cst_38 = arith.constant dense<0.000000e+00> : vector<8x512xf32>
    %74 = tpu.matmul %73, %71, %cst_38 {dimension_numbers = #tpu.dot_dimension_numbers<[1], [0], [0], [1], [0, 0, 1, 1], [], []>} : vector<8x8xf32>, vector<8x512xf32>, vector<8x512xf32> -> vector<8x512xf32>
    %75 = arith.addf %67, %74 : vector<8x512xf32>
    %c497_i32 = arith.constant 497 : i32
    %76 = tpu.dynamic_rotate %32 by %c497_i32 dim 1 : vector<8x512xf32>, i32 -> vector<8x512xf32>
    %77 = vector.extract_strided_slice %4 {offsets = [6, 0], sizes = [1, 512], strides = [1, 1]} : vector<9x512xf32> to vector<1x512xf32>
    %78 = vector.broadcast %77 : vector<1x512xf32> to vector<8x512xf32>
    %79 = arith.mulf %76, %78 : vector<8x512xf32>
    %c6 = arith.constant 6 : index
    %c0_39 = arith.constant 0 : index
    %c0_40 = arith.constant 0 : index
    %80 = vector.load %arg4[%c6, %c0_39, %c0_40] : memref<9x8x8xf32, #tpu.memory_space<vmem>>, vector<1x8x8xf32>
    %81 = vector.shape_cast %80 : vector<1x8x8xf32> to vector<8x8xf32>
    %cst_41 = arith.constant dense<0.000000e+00> : vector<8x512xf32>
    %82 = tpu.matmul %81, %79, %cst_41 {dimension_numbers = #tpu.dot_dimension_numbers<[1], [0], [0], [1], [0, 0, 1, 1], [], []>} : vector<8x8xf32>, vector<8x512xf32>, vector<8x512xf32> -> vector<8x512xf32>
    %83 = arith.addf %75, %82 : vector<8x512xf32>
    %c496_i32 = arith.constant 496 : i32
    %84 = tpu.dynamic_rotate %32 by %c496_i32 dim 1 : vector<8x512xf32>, i32 -> vector<8x512xf32>
    %85 = vector.extract_strided_slice %4 {offsets = [7, 0], sizes = [1, 512], strides = [1, 1]} : vector<9x512xf32> to vector<1x512xf32>
    %86 = vector.broadcast %85 : vector<1x512xf32> to vector<8x512xf32>
    %87 = arith.mulf %84, %86 : vector<8x512xf32>
    %c7 = arith.constant 7 : index
    %c0_42 = arith.constant 0 : index
    %c0_43 = arith.constant 0 : index
    %88 = vector.load %arg4[%c7, %c0_42, %c0_43] : memref<9x8x8xf32, #tpu.memory_space<vmem>>, vector<1x8x8xf32>
    %89 = vector.shape_cast %88 : vector<1x8x8xf32> to vector<8x8xf32>
    %cst_44 = arith.constant dense<0.000000e+00> : vector<8x512xf32>
    %90 = tpu.matmul %89, %87, %cst_44 {dimension_numbers = #tpu.dot_dimension_numbers<[1], [0], [0], [1], [0, 0, 1, 1], [], []>} : vector<8x8xf32>, vector<8x512xf32>, vector<8x512xf32> -> vector<8x512xf32>
    %91 = arith.addf %83, %90 : vector<8x512xf32>
    %c495_i32 = arith.constant 495 : i32
    %92 = tpu.dynamic_rotate %32 by %c495_i32 dim 1 : vector<8x512xf32>, i32 -> vector<8x512xf32>
    %93 = vector.extract_strided_slice %4 {offsets = [8, 0], sizes = [1, 512], strides = [1, 1]} : vector<9x512xf32> to vector<1x512xf32>
    %94 = vector.broadcast %93 : vector<1x512xf32> to vector<8x512xf32>
    %95 = arith.mulf %92, %94 : vector<8x512xf32>
    %c8 = arith.constant 8 : index
    %c0_45 = arith.constant 0 : index
    %c0_46 = arith.constant 0 : index
    %96 = vector.load %arg4[%c8, %c0_45, %c0_46] : memref<9x8x8xf32, #tpu.memory_space<vmem>>, vector<1x8x8xf32>
    %97 = vector.shape_cast %96 : vector<1x8x8xf32> to vector<8x8xf32>
    %cst_47 = arith.constant dense<0.000000e+00> : vector<8x512xf32>
    %98 = tpu.matmul %97, %95, %cst_47 {dimension_numbers = #tpu.dot_dimension_numbers<[1], [0], [0], [1], [0, 0, 1, 1], [], []>} : vector<8x8xf32>, vector<8x512xf32>, vector<8x512xf32> -> vector<8x512xf32>
    %99 = arith.addf %91, %98 : vector<8x512xf32>
    %c0_48 = arith.constant 0 : index
    %c0_49 = arith.constant 0 : index
    %100 = vector.load %arg5[%c0_48, %c0_49] : memref<8x1xf32, #tpu.memory_space<vmem>>, vector<8x1xf32>
    %101 = vector.broadcast %100 : vector<8x1xf32> to vector<8x512xf32>
    %102 = arith.addf %99, %101 : vector<8x512xf32>
    %c8_50 = arith.constant 8 : index
    %c0_51 = arith.constant 0 : index
    %103 = vector.load %arg11[%c8_50, %c0_51] : memref<24x512xf32, #tpu.memory_space<vmem>>, vector<8x512xf32>
    tpu.vector_store %arg11[%c8_50, %c0_51], %102 {strides = array<i32>} : memref<24x512xf32, #tpu.memory_space<vmem>>, vector<8x512xf32>,
    %c0_52 = arith.constant 0 : index
    %c0_53 = arith.constant 0 : index
    %104 = vector.load %arg11[%c0_52, %c0_53] : memref<24x512xf32, #tpu.memory_space<vmem>>, vector<16x512xf32>
    %cst_54 = arith.constant dense<0.000000e+00> : vector<16xf32>
    %105 = vector.multi_reduction <add>, %104, %cst_54 [1] : vector<16x512xf32> to vector<16xf32>
    %106 = vector.shape_cast %105 : vector<16xf32> to vector<16x1xf32>
    %cst_55 = arith.constant 5.120000e+02 : f32
    %107 = vector.broadcast %cst_55 : f32 to vector<16x1xf32>
    %108 = arith.divf %106, %107 : vector<16x1xf32>
    %109 = arith.mulf %104, %104 : vector<16x512xf32>
    %cst_56 = arith.constant dense<0.000000e+00> : vector<16xf32>
    %110 = vector.multi_reduction <add>, %109, %cst_56 [1] : vector<16x512xf32> to vector<16xf32>
    %111 = vector.shape_cast %110 : vector<16xf32> to vector<16x1xf32>
    %cst_57 = arith.constant 5.120000e+02 : f32
    %112 = vector.broadcast %cst_57 : f32 to vector<16x1xf32>
    %113 = arith.divf %111, %112 : vector<16x1xf32>
    %114 = arith.mulf %108, %108 : vector<16x1xf32>
    %115 = arith.subf %113, %114 : vector<16x1xf32>
    %cst_58 = arith.constant 0.000000e+00 : f32
    %116 = vector.broadcast %cst_58 : f32 to vector<16x1xf32>
    %117 = arith.maximumf %115, %116 : vector<16x1xf32>
    %c0_59 = arith.constant 0 : index
    %c0_60 = arith.constant 0 : index
    %118 = vector.load %arg6[%c0_59, %c0_60] : memref<16x1xf32, #tpu.memory_space<vmem>>, vector<16x1xf32>
    %cst_61 = arith.constant 9.99999974E-6 : f32
    %119 = vector.broadcast %cst_61 : f32 to vector<16x1xf32>
    %120 = arith.addf %117, %119 : vector<16x1xf32>
    %121 = math.rsqrt %120 : vector<16x1xf32>
    %122 = arith.mulf %118, %121 : vector<16x1xf32>
    %c0_62 = arith.constant 0 : index
    %c0_63 = arith.constant 0 : index
    %123 = vector.load %arg7[%c0_62, %c0_63] : memref<16x1xf32, #tpu.memory_space<vmem>>, vector<16x1xf32>
    %124 = arith.mulf %108, %122 : vector<16x1xf32>
    %125 = arith.subf %123, %124 : vector<16x1xf32>
    %126 = vector.broadcast %122 : vector<16x1xf32> to vector<16x512xf32>
    %127 = arith.mulf %104, %126 : vector<16x512xf32>
    %128 = vector.broadcast %125 : vector<16x1xf32> to vector<16x512xf32>
    %129 = arith.addf %127, %128 : vector<16x512xf32>
    %cst_64 = arith.constant 0.000000e+00 : f32
    %130 = vector.broadcast %cst_64 : f32 to vector<16x512xf32>
    %131 = arith.maximumf %129, %130 : vector<16x512xf32>
    %c17_i32_65 = arith.constant 17 : i32
    %132 = tpu.dynamic_rotate %131 by %c17_i32_65 dim 1 : vector<16x512xf32>, i32 -> vector<16x512xf32>
    %133 = vector.extract_strided_slice %4 {offsets = [0, 0], sizes = [1, 512], strides = [1, 1]} : vector<9x512xf32> to vector<1x512xf32>
    %134 = vector.broadcast %133 : vector<1x512xf32> to vector<16x512xf32>
    %135 = arith.mulf %132, %134 : vector<16x512xf32>
    %c0_66 = arith.constant 0 : index
    %c0_67 = arith.constant 0 : index
    %c0_68 = arith.constant 0 : index
    %136 = vector.load %arg8[%c0_66, %c0_67, %c0_68] : memref<9x8x16xf32, #tpu.memory_space<vmem>>, vector<1x8x16xf32>
    %137 = vector.shape_cast %136 : vector<1x8x16xf32> to vector<8x16xf32>
    %cst_69 = arith.constant dense<0.000000e+00> : vector<8x512xf32>
    %138 = tpu.matmul %137, %135, %cst_69 {dimension_numbers = #tpu.dot_dimension_numbers<[1], [0], [0], [1], [0, 0, 1, 1], [], []>} : vector<8x16xf32>, vector<16x512xf32>, vector<8x512xf32> -> vector<8x512xf32>
    %c16_i32_70 = arith.constant 16 : i32
    %139 = tpu.dynamic_rotate %131 by %c16_i32_70 dim 1 : vector<16x512xf32>, i32 -> vector<16x512xf32>
    %140 = vector.extract_strided_slice %4 {offsets = [1, 0], sizes = [1, 512], strides = [1, 1]} : vector<9x512xf32> to vector<1x512xf32>
    %141 = vector.broadcast %140 : vector<1x512xf32> to vector<16x512xf32>
    %142 = arith.mulf %139, %141 : vector<16x512xf32>
    %c1_71 = arith.constant 1 : index
    %c0_72 = arith.constant 0 : index
    %c0_73 = arith.constant 0 : index
    %143 = vector.load %arg8[%c1_71, %c0_72, %c0_73] : memref<9x8x16xf32, #tpu.memory_space<vmem>>, vector<1x8x16xf32>
    %144 = vector.shape_cast %143 : vector<1x8x16xf32> to vector<8x16xf32>
    %cst_74 = arith.constant dense<0.000000e+00> : vector<8x512xf32>
    %145 = tpu.matmul %144, %142, %cst_74 {dimension_numbers = #tpu.dot_dimension_numbers<[1], [0], [0], [1], [0, 0, 1, 1], [], []>} : vector<8x16xf32>, vector<16x512xf32>, vector<8x512xf32> -> vector<8x512xf32>
    %146 = arith.addf %138, %145 : vector<8x512xf32>
    %c15_i32_75 = arith.constant 15 : i32
    %147 = tpu.dynamic_rotate %131 by %c15_i32_75 dim 1 : vector<16x512xf32>, i32 -> vector<16x512xf32>
    %148 = vector.extract_strided_slice %4 {offsets = [2, 0], sizes = [1, 512], strides = [1, 1]} : vector<9x512xf32> to vector<1x512xf32>
    %149 = vector.broadcast %148 : vector<1x512xf32> to vector<16x512xf32>
    %150 = arith.mulf %147, %149 : vector<16x512xf32>
    %c2_76 = arith.constant 2 : index
    %c0_77 = arith.constant 0 : index
    %c0_78 = arith.constant 0 : index
    %151 = vector.load %arg8[%c2_76, %c0_77, %c0_78] : memref<9x8x16xf32, #tpu.memory_space<vmem>>, vector<1x8x16xf32>
    %152 = vector.shape_cast %151 : vector<1x8x16xf32> to vector<8x16xf32>
    %cst_79 = arith.constant dense<0.000000e+00> : vector<8x512xf32>
    %153 = tpu.matmul %152, %150, %cst_79 {dimension_numbers = #tpu.dot_dimension_numbers<[1], [0], [0], [1], [0, 0, 1, 1], [], []>} : vector<8x16xf32>, vector<16x512xf32>, vector<8x512xf32> -> vector<8x512xf32>
    %154 = arith.addf %146, %153 : vector<8x512xf32>
    %c1_i32_80 = arith.constant 1 : i32
    %155 = tpu.dynamic_rotate %131 by %c1_i32_80 dim 1 : vector<16x512xf32>, i32 -> vector<16x512xf32>
    %156 = vector.extract_strided_slice %4 {offsets = [3, 0], sizes = [1, 512], strides = [1, 1]} : vector<9x512xf32> to vector<1x512xf32>
    %157 = vector.broadcast %156 : vector<1x512xf32> to vector<16x512xf32>
    %158 = arith.mulf %155, %157 : vector<16x512xf32>
    %c3_81 = arith.constant 3 : index
    %c0_82 = arith.constant 0 : index
    %c0_83 = arith.constant 0 : index
    %159 = vector.load %arg8[%c3_81, %c0_82, %c0_83] : memref<9x8x16xf32, #tpu.memory_space<vmem>>, vector<1x8x16xf32>
    %160 = vector.shape_cast %159 : vector<1x8x16xf32> to vector<8x16xf32>
    %cst_84 = arith.constant dense<0.000000e+00> : vector<8x512xf32>
    %161 = tpu.matmul %160, %158, %cst_84 {dimension_numbers = #tpu.dot_dimension_numbers<[1], [0], [0], [1], [0, 0, 1, 1], [], []>} : vector<8x16xf32>, vector<16x512xf32>, vector<8x512xf32> -> vector<8x512xf32>
    %162 = arith.addf %154, %161 : vector<8x512xf32>
    %c4_85 = arith.constant 4 : index
    %c0_86 = arith.constant 0 : index
    %c0_87 = arith.constant 0 : index
    %163 = vector.load %arg8[%c4_85, %c0_86, %c0_87] : memref<9x8x16xf32, #tpu.memory_space<vmem>>, vector<1x8x16xf32>
    %164 = vector.shape_cast %163 : vector<1x8x16xf32> to vector<8x16xf32>
    %cst_88 = arith.constant dense<0.000000e+00> : vector<8x512xf32>
    %165 = tpu.matmul %164, %131, %cst_88 {dimension_numbers = #tpu.dot_dimension_numbers<[1], [0], [0], [1], [0, 0, 1, 1], [], []>} : vector<8x16xf32>, vector<16x512xf32>, vector<8x512xf32> -> vector<8x512xf32>
    %166 = arith.addf %162, %165 : vector<8x512xf32>
    %c511_i32_89 = arith.constant 511 : i32
    %167 = tpu.dynamic_rotate %131 by %c511_i32_89 dim 1 : vector<16x512xf32>, i32 -> vector<16x512xf32>
    %168 = vector.extract_strided_slice %4 {offsets = [5, 0], sizes = [1, 512], strides = [1, 1]} : vector<9x512xf32> to vector<1x512xf32>
    %169 = vector.broadcast %168 : vector<1x512xf32> to vector<16x512xf32>
    %170 = arith.mulf %167, %169 : vector<16x512xf32>
    %c5_90 = arith.constant 5 : index
    %c0_91 = arith.constant 0 : index
    %c0_92 = arith.constant 0 : index
    %171 = vector.load %arg8[%c5_90, %c0_91, %c0_92] : memref<9x8x16xf32, #tpu.memory_space<vmem>>, vector<1x8x16xf32>
    %172 = vector.shape_cast %171 : vector<1x8x16xf32> to vector<8x16xf32>
    %cst_93 = arith.constant dense<0.000000e+00> : vector<8x512xf32>
    %173 = tpu.matmul %172, %170, %cst_93 {dimension_numbers = #tpu.dot_dimension_numbers<[1], [0], [0], [1], [0, 0, 1, 1], [], []>} : vector<8x16xf32>, vector<16x512xf32>, vector<8x512xf32> -> vector<8x512xf32>
    %174 = arith.addf %166, %173 : vector<8x512xf32>
    %c497_i32_94 = arith.constant 497 : i32
    %175 = tpu.dynamic_rotate %131 by %c497_i32_94 dim 1 : vector<16x512xf32>, i32 -> vector<16x512xf32>
    %176 = vector.extract_strided_slice %4 {offsets = [6, 0], sizes = [1, 512], strides = [1, 1]} : vector<9x512xf32> to vector<1x512xf32>
    %177 = vector.broadcast %176 : vector<1x512xf32> to vector<16x512xf32>
    %178 = arith.mulf %175, %177 : vector<16x512xf32>
    %c6_95 = arith.constant 6 : index
    %c0_96 = arith.constant 0 : index
    %c0_97 = arith.constant 0 : index
    %179 = vector.load %arg8[%c6_95, %c0_96, %c0_97] : memref<9x8x16xf32, #tpu.memory_space<vmem>>, vector<1x8x16xf32>
    %180 = vector.shape_cast %179 : vector<1x8x16xf32> to vector<8x16xf32>
    %cst_98 = arith.constant dense<0.000000e+00> : vector<8x512xf32>
    %181 = tpu.matmul %180, %178, %cst_98 {dimension_numbers = #tpu.dot_dimension_numbers<[1], [0], [0], [1], [0, 0, 1, 1], [], []>} : vector<8x16xf32>, vector<16x512xf32>, vector<8x512xf32> -> vector<8x512xf32>
    %182 = arith.addf %174, %181 : vector<8x512xf32>
    %c496_i32_99 = arith.constant 496 : i32
    %183 = tpu.dynamic_rotate %131 by %c496_i32_99 dim 1 : vector<16x512xf32>, i32 -> vector<16x512xf32>
    %184 = vector.extract_strided_slice %4 {offsets = [7, 0], sizes = [1, 512], strides = [1, 1]} : vector<9x512xf32> to vector<1x512xf32>
    %185 = vector.broadcast %184 : vector<1x512xf32> to vector<16x512xf32>
    %186 = arith.mulf %183, %185 : vector<16x512xf32>
    %c7_100 = arith.constant 7 : index
    %c0_101 = arith.constant 0 : index
    %c0_102 = arith.constant 0 : index
    %187 = vector.load %arg8[%c7_100, %c0_101, %c0_102] : memref<9x8x16xf32, #tpu.memory_space<vmem>>, vector<1x8x16xf32>
    %188 = vector.shape_cast %187 : vector<1x8x16xf32> to vector<8x16xf32>
    %cst_103 = arith.constant dense<0.000000e+00> : vector<8x512xf32>
    %189 = tpu.matmul %188, %186, %cst_103 {dimension_numbers = #tpu.dot_dimension_numbers<[1], [0], [0], [1], [0, 0, 1, 1], [], []>} : vector<8x16xf32>, vector<16x512xf32>, vector<8x512xf32> -> vector<8x512xf32>
    %190 = arith.addf %182, %189 : vector<8x512xf32>
    %c495_i32_104 = arith.constant 495 : i32
    %191 = tpu.dynamic_rotate %131 by %c495_i32_104 dim 1 : vector<16x512xf32>, i32 -> vector<16x512xf32>
    %192 = vector.extract_strided_slice %4 {offsets = [8, 0], sizes = [1, 512], strides = [1, 1]} : vector<9x512xf32> to vector<1x512xf32>
    %193 = vector.broadcast %192 : vector<1x512xf32> to vector<16x512xf32>
    %194 = arith.mulf %191, %193 : vector<16x512xf32>
    %c8_105 = arith.constant 8 : index
    %c0_106 = arith.constant 0 : index
    %c0_107 = arith.constant 0 : index
    %195 = vector.load %arg8[%c8_105, %c0_106, %c0_107] : memref<9x8x16xf32, #tpu.memory_space<vmem>>, vector<1x8x16xf32>
    %196 = vector.shape_cast %195 : vector<1x8x16xf32> to vector<8x16xf32>
    %cst_108 = arith.constant dense<0.000000e+00> : vector<8x512xf32>
    %197 = tpu.matmul %196, %194, %cst_108 {dimension_numbers = #tpu.dot_dimension_numbers<[1], [0], [0], [1], [0, 0, 1, 1], [], []>} : vector<8x16xf32>, vector<16x512xf32>, vector<8x512xf32> -> vector<8x512xf32>
    %198 = arith.addf %190, %197 : vector<8x512xf32>
    %c0_109 = arith.constant 0 : index
    %c0_110 = arith.constant 0 : index
    %199 = vector.load %arg9[%c0_109, %c0_110] : memref<8x1xf32, #tpu.memory_space<vmem>>, vector<8x1xf32>
    %200 = vector.broadcast %199 : vector<8x1xf32> to vector<8x512xf32>
    %201 = arith.addf %198, %200 : vector<8x512xf32>
    %c16 = arith.constant 16 : index
    %c0_111 = arith.constant 0 : index
    %202 = vector.load %arg11[%c16, %c0_111] : memref<24x512xf32, #tpu.memory_space<vmem>>, vector<8x512xf32>
    tpu.vector_store %arg11[%c16, %c0_111], %201 {strides = array<i32>} : memref<24x512xf32, #tpu.memory_space<vmem>>, vector<8x512xf32>,
    %c0_112 = arith.constant 0 : index
    %c0_113 = arith.constant 0 : index
    %203 = vector.load %arg11[%c0_112, %c0_113] : memref<24x512xf32, #tpu.memory_space<vmem>>, vector<4x512xf32>
    %c0_114 = arith.constant 0 : index
    %c0_115 = arith.constant 0 : index
    %204 = vector.load %arg10[%c0_114, %c0_115] : memref<20x512xf32, #tpu.memory_space<vmem>>, vector<4x512xf32>
    tpu.vector_store %arg10[%c0_114, %c0_115], %203 {strides = array<i32>} : memref<20x512xf32, #tpu.memory_space<vmem>>, vector<4x512xf32>,
    %c8_116 = arith.constant 8 : index
    %c0_117 = arith.constant 0 : index
    %205 = vector.load %arg11[%c8_116, %c0_117] : memref<24x512xf32, #tpu.memory_space<vmem>>, vector<8x512xf32>
    %c4_118 = arith.constant 4 : index
    %c0_119 = arith.constant 0 : index
    %206 = vector.load %arg10[%c4_118, %c0_119] : memref<20x512xf32, #tpu.memory_space<vmem>>, vector<8x512xf32>
    tpu.vector_store %arg10[%c4_118, %c0_119], %205 {strides = array<i32>} : memref<20x512xf32, #tpu.memory_space<vmem>>, vector<8x512xf32>,
    %c16_120 = arith.constant 16 : index
    %c0_121 = arith.constant 0 : index
    %207 = vector.load %arg11[%c16_120, %c0_121] : memref<24x512xf32, #tpu.memory_space<vmem>>, vector<8x512xf32>
    %c12 = arith.constant 12 : index
    %c0_122 = arith.constant 0 : index
    %208 = vector.load %arg10[%c12, %c0_122] : memref<20x512xf32, #tpu.memory_space<vmem>>, vector<8x512xf32>
    tpu.vector_store %arg10[%c12, %c0_122], %207 {strides = array<i32>} : memref<20x512xf32, #tpu.memory_space<vmem>>, vector<8x512xf32>,
    return
  }
}

</mosaic_0001>

<llo_original>
// kernel: dense_block_forward.1
$region0: #{dense_block_forward.1}
  #allocation0 [shape = 'u32[]', space=smem, size = 0x4, offset = 0x4, fixed_abs, tag = 'smem constant byte address 0x4 - core index']
  #allocation1 [shape = 'u32[72,128]{1,0:T(1,128)}', space=vmem, size = 0x9000, scoped, tag = 'internal scratch']
  #allocation2 [shape = 'f32[24,512]{1,0:T(8,128)}', space=vmem, size = 0xc000, scoped, tag = 'scratch operand']
  %s0 = inlined_call_operand.vmem [shape: f32[4,512], index: 0, kind: input, shape index: {}]
  %s1 = inlined_call_operand.vmem [shape: f32[9,512], index: 1, kind: input, shape index: {}]
  %s2 = inlined_call_operand.vmem [shape: f32[8,1], index: 2, kind: input, shape index: {}]
  %s3 = inlined_call_operand.vmem [shape: f32[8,1], index: 3, kind: input, shape index: {}]
  %s4 = inlined_call_operand.vmem [shape: f32[9,8,8], index: 4, kind: input, shape index: {}]
  %s5 = inlined_call_operand.vmem [shape: f32[8,1], index: 5, kind: input, shape index: {}]
  %s6 = inlined_call_operand.vmem [shape: f32[16,1], index: 6, kind: input, shape index: {}]
  %s7 = inlined_call_operand.vmem [shape: f32[16,1], index: 7, kind: input, shape index: {}]
  %s8 = inlined_call_operand.vmem [shape: f32[9,8,16], index: 8, kind: input, shape index: {}]
  %s9 = inlined_call_operand.vmem [shape: f32[8,1], index: 9, kind: input, shape index: {}]
  %s10 = inlined_call_operand.vmem [shape: f32[20,512], index: 10, kind: output, shape index: {}]
  %s11 = sld [smem:[#allocation0]]
  $region50: #{dense_block_forward.1} parent=0
    _
  %s13 = ssub.s32 1, %s11
  %s14 = scalar_select 0, %s13, %s11
  // Predicated region
  $region2: #{dense_block_forward.1} parent=0 // pred_check
    _
  $region3: #{dense_block_forward.1} parent=0 // pred_check_branch
    %16 = sbr.rel (0) target = $region5
  $region4: #{dense_block_forward.1} parent=0 // pred_region
    _
  $region5: #{dense_block_forward.1} parent=0 // pred_fallthru
    _
  // Predicated region
  $region6: #{dense_block_forward.1} parent=0 // pred_check
    _
  $region7: #{dense_block_forward.1} parent=0 // pred_check_branch
    %18 = sbr.rel (0) target = $region9
  $region8: #{dense_block_forward.1} parent=0 // pred_region
    _
  $region9: #{dense_block_forward.1} parent=0 // pred_fallthru
    _
  // Predicated region
  $region10: #{dense_block_forward.1} parent=0 // pred_check
    _
  $region11: #{dense_block_forward.1} parent=0 // pred_check_branch
    %20 = sbr.rel (0) target = $region13
  $region12: #{dense_block_forward.1} parent=0 // pred_region
    _
  $region13: #{dense_block_forward.1} parent=0 // pred_fallthru
    _
  // Predicated region
  $region14: #{dense_block_forward.1} parent=0 // pred_check
    _
  $region15: #{dense_block_forward.1} parent=0 // pred_check_branch
    %22 = sbr.rel (0) target = $region17
  $region16: #{dense_block_forward.1} parent=0 // pred_region
    _
  $region17: #{dense_block_forward.1} parent=0 // pred_fallthru
    _
  // Predicated region
  $region18: #{dense_block_forward.1} parent=0 // pred_check
    _
  $region19: #{dense_block_forward.1} parent=0 // pred_check_branch
    %24 = sbr.rel (0) target = $region21
  $region20: #{dense_block_forward.1} parent=0 // pred_region
    _
  $region21: #{dense_block_forward.1} parent=0 // pred_fallthru
    _
  // Predicated region
  $region22: #{dense_block_forward.1} parent=0 // pred_check
    _
  $region23: #{dense_block_forward.1} parent=0 // pred_check_branch
    %26 = sbr.rel (0) target = $region25
  $region24: #{dense_block_forward.1} parent=0 // pred_region
    _
  $region25: #{dense_block_forward.1} parent=0 // pred_fallthru
    _
  // Predicated region
  $region26: #{dense_block_forward.1} parent=0 // pred_check
    _
  $region27: #{dense_block_forward.1} parent=0 // pred_check_branch
    %28 = sbr.rel (0) target = $region29
  $region28: #{dense_block_forward.1} parent=0 // pred_region
    _
  $region29: #{dense_block_forward.1} parent=0 // pred_fallthru
    _
  // Predicated region
  $region30: #{dense_block_forward.1} parent=0 // pred_check
    _
  $region31: #{dense_block_forward.1} parent=0 // pred_check_branch
    %30 = sbr.rel (0) target = $region33
  $region32: #{dense_block_forward.1} parent=0 // pred_region
    _
  $region33: #{dense_block_forward.1} parent=0 // pred_fallthru
    _
  // Predicated region
  $region34: #{dense_block_forward.1} parent=0 // pred_check
    _
  $region35: #{dense_block_forward.1} parent=0 // pred_check_branch
    %32 = sbr.rel (0) target = $region37
  $region36: #{dense_block_forward.1} parent=0 // pred_region
    _
  $region37: #{dense_block_forward.1} parent=0 // pred_fallthru
    _
  // Predicated region
  $region38: #{dense_block_forward.1} parent=0 // pred_check
    _
  $region39: #{dense_block_forward.1} parent=0 // pred_check_branch
    %34 = sbr.rel (0) target = $region41
  $region40: #{dense_block_forward.1} parent=0 // pred_region
    _
  $region41: #{dense_block_forward.1} parent=0 // pred_fallthru
    _
  %35 = vst [vmem:[#allocation2] sm:$0xff] 0.0
  %36 = vst [vmem:[#allocation2 + $0x8] sm:$0xff] 0.0
  %37 = vst [vmem:[#allocation2 + $0x10] sm:$0xff] 0.0
  %38 = vst [vmem:[#allocation2 + $0x18] sm:$0xff] 0.0
  %39 = vst [vmem:[#allocation2 + $0x20] sm:$0xff] 0.0
  %40 = vst [vmem:[#allocation2 + $0x28] sm:$0xff] 0.0
  %41 = vst [vmem:[#allocation2 + $0x30] sm:$0xff] 0.0
  %42 = vst [vmem:[#allocation2 + $0x38] sm:$0xff] 0.0
  %43 = vst [vmem:[#allocation2 + $0x40] sm:$0xff] 0.0
  %44 = vst [vmem:[#allocation2 + $0x48] sm:$0xff] 0.0
  %45 = vst [vmem:[#allocation2 + $0x50] sm:$0xff] 0.0
  %46 = vst [vmem:[#allocation2 + $0x58] sm:$0xff] 0.0
  %v47 = vld [vmem:[%s0] sm:$0xff]
  %v48 = vld [vmem:[%s0 + $0x8] sm:$0xff]
  %51 = vst [vmem:[#allocation1] ss:$2 sm:$0xff] %v47
  %s52 = scalar_lea.vmem [#allocation1], 16
  %53 = vst [vmem:[%s52] ss:$2 sm:$0xff] %v48
  %v54 = vld.sshfl [vmem:[#allocation1] sm:$0xff pattern:$0x75316420]
  %v55 = vld.sshfl [vmem:[#allocation1 + $0x8] sm:$0xff pattern:$0x75316420]
  %v56 = vld.sshfl [vmem:[#allocation1 + $0x10] sm:$0xff pattern:$0x75316420]
  %v57 = vld.sshfl [vmem:[#allocation1 + $0x18] sm:$0xff pattern:$0x75316420]
  %62 = vst [vmem:[#allocation2] sm:$0xf] %v54
  %63 = vst [vmem:[#allocation2 + $0x8] sm:$0xf] %v55
  %64 = vst [vmem:[#allocation2 + $0x10] sm:$0xf] %v56
  %65 = vst [vmem:[#allocation2 + $0x18] sm:$0xf] %v57
  %v66 = vld [vmem:[%s1] sm:$0xff]
  %v67 = vld [vmem:[%s1 + $0x8] sm:$0xff]
  %v68 = vld [vmem:[%s1 + $0x10] sm:$0xff]
  %v69 = vld [vmem:[%s1 + $0x18] sm:$0xff]
  %v70 = vld [vmem:[%s1 + $0x20] sm:$0x1]
  %v71 = vld [vmem:[%s1 + $0x28] sm:$0x1]
  %v72 = vld [vmem:[%s1 + $0x30] sm:$0x1]
  %v73 = vld [vmem:[%s1 + $0x38] sm:$0x1]
  %v74 = vld [vmem:[#allocation2] sm:$0xff]
  %v75 = vld [vmem:[#allocation2 + $0x8] sm:$0xff]
  %v76 = vld [vmem:[#allocation2 + $0x10] sm:$0xff]
  %v77 = vld [vmem:[#allocation2 + $0x18] sm:$0xff]
  %v78 = vadd.f32 %v74, %v75
  %v79 = vadd.f32 %v78, %v76
  %v80 = vadd.f32 %v79, %v77
  %81 = vadd.xlane.f32.xlu0 %v80
  %v82 = vpop.xlane.xlu0 %81
  %v83 = vrcp.pop 512.0
  %v84 = vmul.f32 512.0, %v83
  %v85 = vsub.f32 1.0, %v84
  %v86 = vmul.f32 %v83, %v85
  %v87 = vadd.f32 %v83, %v86
  %vm88 = vweird.f32 %v83
  %v89 = vsel %vm88, %v83, %v87
  %v90 = vmul.f32 %v82, %v89
  %v91 = vmul.f32 %v74, %v74
  %v92 = vmul.f32 %v75, %v75
  %v93 = vmul.f32 %v76, %v76
  %v94 = vmul.f32 %v77, %v77
  %v95 = vadd.f32 %v91, %v92
  %v96 = vadd.f32 %v95, %v93
  %v97 = vadd.f32 %v96, %v94
  %98 = vadd.xlane.f32.xlu0 %v97
  %v99 = vpop.xlane.xlu0 %98
  %v100 = vmul.f32 %v99, %v89
  %v101 = vmul.f32 %v90, %v90
  %v102 = vsub.f32 %v100, %v101
  %v103 = vmax.f32 %v102, 0.0
  %v104 = vld [vmem:[%s2] sm:$0xff]
  %v105 = vadd.f32 %v103, 1e-05
  %v106 = vrsqrt.pop %v105
  %v107 = vmul.f32 %v106, %v105
  %v108 = vmul.f32 %v107, %v106
  %v109 = vmul.f32 0.5, %v108
  %v110 = vsub.f32 1.5, %v109
  %v111 = vmul.f32 %v106, %v110
  %vm112 = vweird.f32 %v105
  %vm113 = vweird.f32 %v106
  %vm114 = vmor %vm112, %vm113
  %v115 = vsel %vm114, %v106, %v111
  %v116 = vmul.f32 %v104, %v115
  %v117 = vld [vmem:[%s3] sm:$0xff]
  %v118 = vmul.f32 %v90, %v116
  %v119 = vsub.f32 %v117, %v118
  %121 = vset.pattern.permute.xlu0 0
  %122 = vperm.xlu0 %121, %v116
  %v123 = vpop.permute.xlu0 %122
  %v125 = vmul.f32 %v74, %v123
  %v126 = vmul.f32 %v75, %v123
  %v127 = vmul.f32 %v76, %v123
  %v128 = vmul.f32 %v77, %v123
  %130 = vset.pattern.permute.xlu0 0
  %131 = vperm.xlu0 %130, %v119
  %v132 = vpop.permute.xlu0 %131
  %v134 = vadd.f32 %v125, %v132
  %v135 = vadd.f32 %v126, %v132
  %v136 = vadd.f32 %v127, %v132
  %v137 = vadd.f32 %v128, %v132
  %v138 = vmax.f32 %v134, 0.0
  %v139 = vmax.f32 %v135, 0.0
  %v140 = vmax.f32 %v136, 0.0
  %v141 = vmax.f32 %v137, 0.0
  %142 = vrot.lane.b32.xlu0 %v138, 17
  %v143 = vpop.permute.xlu0 %142
  %144 = vrot.lane.b32.xlu0 %v139, 17
  %v145 = vpop.permute.xlu0 %144
  %146 = vrot.lane.b32.xlu0 %v140, 17
  %v147 = vpop.permute.xlu0 %146
  %148 = vrot.lane.b32.xlu0 %v141, 17
  %v149 = vpop.permute.xlu0 %148
  %v150 = vlaneseq
  %v151 = vand.u32 %v150, 127
  %vm152 = vcmp.lt.s32.totalorder %v151, 17
  %v153 = vsel %vm152, %v147, %v149
  %v154 = vsel %vm152, %v145, %v147
  %v155 = vsel %vm152, %v143, %v145
  %v156 = vsel %vm152, %v149, %v143
  %v157 = vperm.slane %v66, 0
  %v158 = vperm.slane %v67, 0
  %v159 = vperm.slane %v68, 0
  %v160 = vperm.slane %v69, 0
  %v161 = vmul.f32 %v156, %v157
  %v162 = vmul.f32 %v155, %v158
  %v163 = vmul.f32 %v154, %v159
  %v164 = vmul.f32 %v153, %v160
  %v165 = vld [vmem:[%s4] sm:$0xff]
  %166 = vrot.lane.b32.xlu0 %v138, 16
  %v167 = vpop.permute.xlu0 %166
  %168 = vrot.lane.b32.xlu0 %v139, 16
  %v169 = vpop.permute.xlu0 %168
  %170 = vrot.lane.b32.xlu0 %v140, 16
  %v171 = vpop.permute.xlu0 %170
  %172 = vrot.lane.b32.xlu0 %v141, 16
  %v173 = vpop.permute.xlu0 %172
  %vm174 = vcmp.lt.s32.totalorder %v151, 16
  %v175 = vsel %vm174, %v171, %v173
  %v176 = vsel %vm174, %v169, %v171
  %v177 = vsel %vm174, %v167, %v169
  %v178 = vsel %vm174, %v173, %v167
  %v179 = vperm.slane %v66, 1
  %v180 = vperm.slane %v67, 1
  %v181 = vperm.slane %v68, 1
  %v182 = vperm.slane %v69, 1
  %v183 = vmul.f32 %v178, %v179
  %v184 = vmul.f32 %v177, %v180
  %v185 = vmul.f32 %v176, %v181
  %v186 = vmul.f32 %v175, %v182
  %s187 = scalar_lea.vmem %s4, 8
  %v188 = vld [vmem:[%s187] sm:$0xff]
  %vm189 = vcmask 64512
  %v191 = vsel %vm189, %v188, 0
  %193 = vmatpush.msra.mxu0 0.0
  %194 = vmatpush.msra.mxu0 0.0
  %195 = vmatpush.msra.mxu0 0.0
  %196 = vmatpush.msra.mxu0 0.0
  %197 = vmatpush.msra.mxu0 0.0
  %198 = vmatpush.msra.mxu0 0.0
  %199 = vmatpush.msra.mxu0 0.0
  %200 = vmatpush.msra.mxu0 0.0
  %201 = vmatpush.msra.mxu0 0.0
  %202 = vmatpush.msra.mxu0 0.0
  %203 = vmatpush.msra.mxu0 0.0
  %204 = vmatpush.msra.mxu0 0.0
  %205 = vmatpush.msra.mxu0 0.0
  %206 = vmatpush.msra.mxu0 0.0
  %207 = vmatpush.msra.mxu0 0.0
  %208 = vmatpush.msra.mxu0 %v183
  %209 = vmatmul.f32.gmra.mxu0 %v191
  %v210 = vpop.f32.mrf.mxu0
  %v211 = vadd.f32 0.0, %v210
  %212 = vdwg.mxu0
  %213 = vmatpush.msra.mxu0 0.0
  %214 = vmatpush.msra.mxu0 0.0
  %215 = vmatpush.msra.mxu0 0.0
  %216 = vmatpush.msra.mxu0 0.0
  %217 = vmatpush.msra.mxu0 0.0
  %218 = vmatpush.msra.mxu0 0.0
  %219 = vmatpush.msra.mxu0 0.0
  %220 = vmatpush.msra.mxu0 0.0
  %221 = vmatpush.msra.mxu0 0.0
  %222 = vmatpush.msra.mxu0 0.0
  %223 = vmatpush.msra.mxu0 0.0
  %224 = vmatpush.msra.mxu0 0.0
  %225 = vmatpush.msra.mxu0 0.0
  %226 = vmatpush.msra.mxu0 0.0
  %227 = vmatpush.msra.mxu0 0.0
  %228 = vmatpush.msra.mxu0 %v184
  %229 = vmatmul.f32.gmra.mxu0 %v191
  %v230 = vpop.f32.mrf.mxu0
  %v231 = vadd.f32 0.0, %v230
  %232 = vdwg.mxu0
  %233 = vmatpush.msra.mxu0 0.0
  %234 = vmatpush.msra.mxu0 0.0
  %235 = vmatpush.msra.mxu0 0.0
  %236 = vmatpush.msra.mxu0 0.0
  %237 = vmatpush.msra.mxu0 0.0
  %238 = vmatpush.msra.mxu0 0.0
  %239 = vmatpush.msra.mxu0 0.0
  %240 = vmatpush.msra.mxu0 0.0
  %241 = vmatpush.msra.mxu0 0.0
  %242 = vmatpush.msra.mxu0 0.0
  %243 = vmatpush.msra.mxu0 0.0
  %244 = vmatpush.msra.mxu0 0.0
  %245 = vmatpush.msra.mxu0 0.0
  %246 = vmatpush.msra.mxu0 0.0
  %247 = vmatpush.msra.mxu0 0.0
  %248 = vmatpush.msra.mxu0 %v185
  %249 = vmatmul.f32.gmra.mxu0 %v191
  %v250 = vpop.f32.mrf.mxu0
  %v251 = vadd.f32 0.0, %v250
  %252 = vdwg.mxu0
  %253 = vmatpush.msra.mxu0 0.0
  %254 = vmatpush.msra.mxu0 0.0
  %255 = vmatpush.msra.mxu0 0.0
  %256 = vmatpush.msra.mxu0 0.0
  %257 = vmatpush.msra.mxu0 0.0
  %258 = vmatpush.msra.mxu0 0.0
  %259 = vmatpush.msra.mxu0 0.0
  %260 = vmatpush.msra.mxu0 0.0
  %261 = vmatpush.msra.mxu0 0.0
  %262 = vmatpush.msra.mxu0 0.0
  %263 = vmatpush.msra.mxu0 0.0
  %264 = vmatpush.msra.mxu0 0.0
  %265 = vmatpush.msra.mxu0 0.0
  %266 = vmatpush.msra.mxu0 0.0
  %267 = vmatpush.msra.mxu0 0.0
  %268 = vmatpush.msra.mxu0 %v186
  %269 = vmatmul.f32.gmra.mxu0 %v191
  %v270 = vpop.f32.mrf.mxu0
  %v271 = vadd.f32 0.0, %v270
  %272 = vdwg.mxu0
  %v274 = vsel %vm189, %v165, 0
  %276 = vmatpush.msra.mxu0 0.0
  %277 = vmatpush.msra.mxu0 0.0
  %278 = vmatpush.msra.mxu0 0.0
  %279 = vmatpush.msra.mxu0 0.0
  %280 = vmatpush.msra.mxu0 0.0
  %281 = vmatpush.msra.mxu0 0.0
  %282 = vmatpush.msra.mxu0 0.0
  %283 = vmatpush.msra.mxu0 0.0
  %284 = vmatpush.msra.mxu0 0.0
  %285 = vmatpush.msra.mxu0 0.0
  %286 = vmatpush.msra.mxu0 0.0
  %287 = vmatpush.msra.mxu0 0.0
  %288 = vmatpush.msra.mxu0 0.0
  %289 = vmatpush.msra.mxu0 0.0
  %290 = vmatpush.msra.mxu0 0.0
  %291 = vmatpush.msra.mxu0 %v161
  %292 = vmatmul.f32.gmra.mxu0 %v274
  %v293 = vpop.f32.mrf.mxu0
  %v294 = vadd.f32 %v211, %v293
  %295 = vdwg.mxu0
  %296 = vmatpush.msra.mxu0 0.0
  %297 = vmatpush.msra.mxu0 0.0
  %298 = vmatpush.msra.mxu0 0.0
  %299 = vmatpush.msra.mxu0 0.0
  %300 = vmatpush.msra.mxu0 0.0
  %301 = vmatpush.msra.mxu0 0.0
  %302 = vmatpush.msra.mxu0 0.0
  %303 = vmatpush.msra.mxu0 0.0
  %304 = vmatpush.msra.mxu0 0.0
  %305 = vmatpush.msra.mxu0 0.0
  %306 = vmatpush.msra.mxu0 0.0
  %307 = vmatpush.msra.mxu0 0.0
  %308 = vmatpush.msra.mxu0 0.0
  %309 = vmatpush.msra.mxu0 0.0
  %310 = vmatpush.msra.mxu0 0.0
  %311 = vmatpush.msra.mxu0 %v162
  %312 = vmatmul.f32.gmra.mxu0 %v274
  %v313 = vpop.f32.mrf.mxu0
  %v314 = vadd.f32 %v231, %v313
  %315 = vdwg.mxu0
  %316 = vmatpush.msra.mxu0 0.0
  %317 = vmatpush.msra.mxu0 0.0
  %318 = vmatpush.msra.mxu0 0.0
  %319 = vmatpush.msra.mxu0 0.0
  %320 = vmatpush.msra.mxu0 0.0
  %321 = vmatpush.msra.mxu0 0.0
  %322 = vmatpush.msra.mxu0 0.0
  %323 = vmatpush.msra.mxu0 0.0
  %324 = vmatpush.msra.mxu0 0.0
  %325 = vmatpush.msra.mxu0 0.0
  %326 = vmatpush.msra.mxu0 0.0
  %327 = vmatpush.msra.mxu0 0.0
  %328 = vmatpush.msra.mxu0 0.0
  %329 = vmatpush.msra.mxu0 0.0
  %330 = vmatpush.msra.mxu0 0.0
  %331 = vmatpush.msra.mxu0 %v163
  %332 = vmatmul.f32.gmra.mxu0 %v274
  %v333 = vpop.f32.mrf.mxu0
  %v334 = vadd.f32 %v251, %v333
  %335 = vdwg.mxu0
  %336 = vmatpush.msra.mxu0 0.0
  %337 = vmatpush.msra.mxu0 0.0
  %338 = vmatpush.msra.mxu0 0.0
  %339 = vmatpush.msra.mxu0 0.0
  %340 = vmatpush.msra.mxu0 0.0
  %341 = vmatpush.msra.mxu0 0.0
  %342 = vmatpush.msra.mxu0 0.0
  %343 = vmatpush.msra.mxu0 0.0
  %344 = vmatpush.msra.mxu0 0.0
  %345 = vmatpush.msra.mxu0 0.0
  %346 = vmatpush.msra.mxu0 0.0
  %347 = vmatpush.msra.mxu0 0.0
  %348 = vmatpush.msra.mxu0 0.0
  %349 = vmatpush.msra.mxu0 0.0
  %350 = vmatpush.msra.mxu0 0.0
  %351 = vmatpush.msra.mxu0 %v164
  %352 = vmatmul.f32.gmra.mxu0 %v274
  %v353 = vpop.f32.mrf.mxu0
  %v354 = vadd.f32 %v271, %v353
  %355 = vdwg.mxu0
  %356 = vrot.lane.b32.xlu0 %v138, 15
  %v357 = vpop.permute.xlu0 %356
  %358 = vrot.lane.b32.xlu0 %v139, 15
  %v359 = vpop.permute.xlu0 %358
  %360 = vrot.lane.b32.xlu0 %v140, 15
  %v361 = vpop.permute.xlu0 %360
  %362 = vrot.lane.b32.xlu0 %v141, 15
  %v363 = vpop.permute.xlu0 %362
  %vm364 = vcmp.lt.s32.totalorder %v151, 15
  %v365 = vsel %vm364, %v361, %v363
  %v366 = vsel %vm364, %v359, %v361
  %v367 = vsel %vm364, %v357, %v359
  %v368 = vsel %vm364, %v363, %v357
  %v369 = vperm.slane %v66, 2
  %v370 = vperm.slane %v67, 2
  %v371 = vperm.slane %v68, 2
  %v372 = vperm.slane %v69, 2
  %v373 = vmul.f32 %v368, %v369
  %v374 = vmul.f32 %v367, %v370
  %v375 = vmul.f32 %v366, %v371
  %v376 = vmul.f32 %v365, %v372
  %s377 = scalar_lea.vmem %s4, 16
  %v378 = vld [vmem:[%s377] sm:$0xff]
  %v380 = vsel %vm189, %v378, 0
  %382 = vmatpush.msra.mxu0 0.0
  %383 = vmatpush.msra.mxu0 0.0
  %384 = vmatpush.msra.mxu0 0.0
  %385 = vmatpush.msra.mxu0 0.0
  %386 = vmatpush.msra.mxu0 0.0
  %387 = vmatpush.msra.mxu0 0.0
  %388 = vmatpush.msra.mxu0 0.0
  %389 = vmatpush.msra.mxu0 0.0
  %390 = vmatpush.msra.mxu0 0.0
  %391 = vmatpush.msra.mxu0 0.0
  %392 = vmatpush.msra.mxu0 0.0
  %393 = vmatpush.msra.mxu0 0.0
  %394 = vmatpush.msra.mxu0 0.0
  %395 = vmatpush.msra.mxu0 0.0
  %396 = vmatpush.msra.mxu0 0.0
  %397 = vmatpush.msra.mxu0 %v373
  %398 = vmatmul.f32.gmra.mxu0 %v380
  %v399 = vpop.f32.mrf.mxu0
  %v400 = vadd.f32 0.0, %v399
  %401 = vdwg.mxu0
  %402 = vmatpush.msra.mxu0 0.0
  %403 = vmatpush.msra.mxu0 0.0
  %404 = vmatpush.msra.mxu0 0.0
  %405 = vmatpush.msra.mxu0 0.0
  %406 = vmatpush.msra.mxu0 0.0
  %407 = vmatpush.msra.mxu0 0.0
  %408 = vmatpush.msra.mxu0 0.0
  %409 = vmatpush.msra.mxu0 0.0
  %410 = vmatpush.msra.mxu0 0.0
  %411 = vmatpush.msra.mxu0 0.0
  %412 = vmatpush.msra.mxu0 0.0
  %413 = vmatpush.msra.mxu0 0.0
  %414 = vmatpush.msra.mxu0 0.0
  %415 = vmatpush.msra.mxu0 0.0
  %416 = vmatpush.msra.mxu0 0.0
  %417 = vmatpush.msra.mxu0 %v374
  %418 = vmatmul.f32.gmra.mxu0 %v380
  %v419 = vpop.f32.mrf.mxu0
  %v420 = vadd.f32 0.0, %v419
  %421 = vdwg.mxu0
  %422 = vmatpush.msra.mxu0 0.0
  %423 = vmatpush.msra.mxu0 0.0
  %424 = vmatpush.msra.mxu0 0.0
  %425 = vmatpush.msra.mxu0 0.0
  %426 = vmatpush.msra.mxu0 0.0
  %427 = vmatpush.msra.mxu0 0.0
  %428 = vmatpush.msra.mxu0 0.0
  %429 = vmatpush.msra.mxu0 0.0
  %430 = vmatpush.msra.mxu0 0.0
  %431 = vmatpush.msra.mxu0 0.0
  %432 = vmatpush.msra.mxu0 0.0
  %433 = vmatpush.msra.mxu0 0.0
  %434 = vmatpush.msra.mxu0 0.0
  %435 = vmatpush.msra.mxu0 0.0
  %436 = vmatpush.msra.mxu0 0.0
  %437 = vmatpush.msra.mxu0 %v375
  %438 = vmatmul.f32.gmra.mxu0 %v380
  %v439 = vpop.f32.mrf.mxu0
  %v440 = vadd.f32 0.0, %v439
  %441 = vdwg.mxu0
  %442 = vmatpush.msra.mxu0 0.0
  %443 = vmatpush.msra.mxu0 0.0
  %444 = vmatpush.msra.mxu0 0.0
  %445 = vmatpush.msra.mxu0 0.0
  %446 = vmatpush.msra.mxu0 0.0
  %447 = vmatpush.msra.mxu0 0.0
  %448 = vmatpush.msra.mxu0 0.0
  %449 = vmatpush.msra.mxu0 0.0
  %450 = vmatpush.msra.mxu0 0.0
  %451 = vmatpush.msra.mxu0 0.0
  %452 = vmatpush.msra.mxu0 0.0
  %453 = vmatpush.msra.mxu0 0.0
  %454 = vmatpush.msra.mxu0 0.0
  %455 = vmatpush.msra.mxu0 0.0
  %456 = vmatpush.msra.mxu0 0.0
  %457 = vmatpush.msra.mxu0 %v376
  %458 = vmatmul.f32.gmra.mxu0 %v380
  %v459 = vpop.f32.mrf.mxu0
  %v460 = vadd.f32 0.0, %v459
  %461 = vdwg.mxu0
  %v462 = vadd.f32 %v294, %v400
  %v463 = vadd.f32 %v314, %v420
  %v464 = vadd.f32 %v334, %v440
  %v465 = vadd.f32 %v354, %v460
  %466 = vrot.lane.b32.xlu0 %v138, 1
  %v467 = vpop.permute.xlu0 %466
  %468 = vrot.lane.b32.xlu0 %v139, 1
  %v469 = vpop.permute.xlu0 %468
  %470 = vrot.lane.b32.xlu0 %v140, 1
  %v471 = vpop.permute.xlu0 %470
  %472 = vrot.lane.b32.xlu0 %v141, 1
  %v473 = vpop.permute.xlu0 %472
  %vm474 = vcmp.lt.s32.totalorder %v151, 1
  %v475 = vsel %vm474, %v471, %v473
  %v476 = vsel %vm474, %v469, %v471
  %v477 = vsel %vm474, %v467, %v469
  %v478 = vsel %vm474, %v473, %v467
  %v479 = vperm.slane %v66, 3
  %v480 = vperm.slane %v67, 3
  %v481 = vperm.slane %v68, 3
  %v482 = vperm.slane %v69, 3
  %v483 = vmul.f32 %v478, %v479
  %v484 = vmul.f32 %v477, %v480
  %v485 = vmul.f32 %v476, %v481
  %v486 = vmul.f32 %v475, %v482
  %s487 = scalar_lea.vmem %s4, 24
  %v488 = vld [vmem:[%s487] sm:$0xff]
  %v490 = vsel %vm189, %v488, 0
  %492 = vmatpush.msra.mxu0 0.0
  %493 = vmatpush.msra.mxu0 0.0
  %494 = vmatpush.msra.mxu0 0.0
  %495 = vmatpush.msra.mxu0 0.0
  %496 = vmatpush.msra.mxu0 0.0
  %497 = vmatpush.msra.mxu0 0.0
  %498 = vmatpush.msra.mxu0 0.0
  %499 = vmatpush.msra.mxu0 0.0
  %500 = vmatpush.msra.mxu0 0.0
  %501 = vmatpush.msra.mxu0 0.0
  %502 = vmatpush.msra.mxu0 0.0
  %503 = vmatpush.msra.mxu0 0.0
  %504 = vmatpush.msra.mxu0 0.0
  %505 = vmatpush.msra.mxu0 0.0
  %506 = vmatpush.msra.mxu0 0.0
  %507 = vmatpush.msra.mxu0 %v483
  %508 = vmatmul.f32.gmra.mxu0 %v490
  %v509 = vpop.f32.mrf.mxu0
  %v510 = vadd.f32 0.0, %v509
  %511 = vdwg.mxu0
  %512 = vmatpush.msra.mxu0 0.0
  %513 = vmatpush.msra.mxu0 0.0
  %514 = vmatpush.msra.mxu0 0.0
  %515 = vmatpush.msra.mxu0 0.0
  %516 = vmatpush.msra.mxu0 0.0
  %517 = vmatpush.msra.mxu0 0.0
  %518 = vmatpush.msra.mxu0 0.0
  %519 = vmatpush.msra.mxu0 0.0
  %520 = vmatpush.msra.mxu0 0.0
  %521 = vmatpush.msra.mxu0 0.0
  %522 = vmatpush.msra.mxu0 0.0
  %523 = vmatpush.msra.mxu0 0.0
  %524 = vmatpush.msra.mxu0 0.0
  %525 = vmatpush.msra.mxu0 0.0
  %526 = vmatpush.msra.mxu0 0.0
  %527 = vmatpush.msra.mxu0 %v484
  %528 = vmatmul.f32.gmra.mxu0 %v490
  %v529 = vpop.f32.mrf.mxu0
  %v530 = vadd.f32 0.0, %v529
  %531 = vdwg.mxu0
  %532 = vmatpush.msra.mxu0 0.0
  %533 = vmatpush.msra.mxu0 0.0
  %534 = vmatpush.msra.mxu0 0.0
  %535 = vmatpush.msra.mxu0 0.0
  %536 = vmatpush.msra.mxu0 0.0
  %537 = vmatpush.msra.mxu0 0.0
  %538 = vmatpush.msra.mxu0 0.0
  %539 = vmatpush.msra.mxu0 0.0
  %540 = vmatpush.msra.mxu0 0.0
  %541 = vmatpush.msra.mxu0 0.0
  %542 = vmatpush.msra.mxu0 0.0
  %543 = vmatpush.msra.mxu0 0.0
  %544 = vmatpush.msra.mxu0 0.0
  %545 = vmatpush.msra.mxu0 0.0
  %546 = vmatpush.msra.mxu0 0.0
  %547 = vmatpush.msra.mxu0 %v485
  %548 = vmatmul.f32.gmra.mxu0 %v490
  %v549 = vpop.f32.mrf.mxu0
  %v550 = vadd.f32 0.0, %v549
  %551 = vdwg.mxu0
  %552 = vmatpush.msra.mxu0 0.0
  %553 = vmatpush.msra.mxu0 0.0
  %554 = vmatpush.msra.mxu0 0.0
  %555 = vmatpush.msra.mxu0 0.0
  %556 = vmatpush.msra.mxu0 0.0
  %557 = vmatpush.msra.mxu0 0.0
  %558 = vmatpush.msra.mxu0 0.0
  %559 = vmatpush.msra.mxu0 0.0
  %560 = vmatpush.msra.mxu0 0.0
  %561 = vmatpush.msra.mxu0 0.0
  %562 = vmatpush.msra.mxu0 0.0
  %563 = vmatpush.msra.mxu0 0.0
  %564 = vmatpush.msra.mxu0 0.0
  %565 = vmatpush.msra.mxu0 0.0
  %566 = vmatpush.msra.mxu0 0.0
  %567 = vmatpush.msra.mxu0 %v486
  %568 = vmatmul.f32.gmra.mxu0 %v490
  %v569 = vpop.f32.mrf.mxu0
  %v570 = vadd.f32 0.0, %v569
  %571 = vdwg.mxu0
  %v572 = vadd.f32 %v462, %v510
  %v573 = vadd.f32 %v463, %v530
  %v574 = vadd.f32 %v464, %v550
  %v575 = vadd.f32 %v465, %v570
  %s576 = scalar_lea.vmem %s4, 32
  %v577 = vld [vmem:[%s576] sm:$0xff]
  %v579 = vsel %vm189, %v577, 0
  %581 = vmatpush.msra.mxu0 0.0
  %582 = vmatpush.msra.mxu0 0.0
  %583 = vmatpush.msra.mxu0 0.0
  %584 = vmatpush.msra.mxu0 0.0
  %585 = vmatpush.msra.mxu0 0.0
  %586 = vmatpush.msra.mxu0 0.0
  %587 = vmatpush.msra.mxu0 0.0
  %588 = vmatpush.msra.mxu0 0.0
  %589 = vmatpush.msra.mxu0 0.0
  %590 = vmatpush.msra.mxu0 0.0
  %591 = vmatpush.msra.mxu0 0.0
  %592 = vmatpush.msra.mxu0 0.0
  %593 = vmatpush.msra.mxu0 0.0
  %594 = vmatpush.msra.mxu0 0.0
  %595 = vmatpush.msra.mxu0 0.0
  %596 = vmatpush.msra.mxu0 %v138
  %597 = vmatmul.f32.gmra.mxu0 %v579
  %v598 = vpop.f32.mrf.mxu0
  %v599 = vadd.f32 0.0, %v598
  %600 = vdwg.mxu0
  %601 = vmatpush.msra.mxu0 0.0
  %602 = vmatpush.msra.mxu0 0.0
  %603 = vmatpush.msra.mxu0 0.0
  %604 = vmatpush.msra.mxu0 0.0
  %605 = vmatpush.msra.mxu0 0.0
  %606 = vmatpush.msra.mxu0 0.0
  %607 = vmatpush.msra.mxu0 0.0
  %608 = vmatpush.msra.mxu0 0.0
  %609 = vmatpush.msra.mxu0 0.0
  %610 = vmatpush.msra.mxu0 0.0
  %611 = vmatpush.msra.mxu0 0.0
  %612 = vmatpush.msra.mxu0 0.0
  %613 = vmatpush.msra.mxu0 0.0
  %614 = vmatpush.msra.mxu0 0.0
  %615 = vmatpush.msra.mxu0 0.0
  %616 = vmatpush.msra.mxu0 %v139
  %617 = vmatmul.f32.gmra.mxu0 %v579
  %v618 = vpop.f32.mrf.mxu0
  %v619 = vadd.f32 0.0, %v618
  %620 = vdwg.mxu0
  %621 = vmatpush.msra.mxu0 0.0
  %622 = vmatpush.msra.mxu0 0.0
  %623 = vmatpush.msra.mxu0 0.0
  %624 = vmatpush.msra.mxu0 0.0
  %625 = vmatpush.msra.mxu0 0.0
  %626 = vmatpush.msra.mxu0 0.0
  %627 = vmatpush.msra.mxu0 0.0
  %628 = vmatpush.msra.mxu0 0.0
  %629 = vmatpush.msra.mxu0 0.0
  %630 = vmatpush.msra.mxu0 0.0
  %631 = vmatpush.msra.mxu0 0.0
  %632 = vmatpush.msra.mxu0 0.0
  %633 = vmatpush.msra.mxu0 0.0
  %634 = vmatpush.msra.mxu0 0.0
  %635 = vmatpush.msra.mxu0 0.0
  %636 = vmatpush.msra.mxu0 %v140
  %637 = vmatmul.f32.gmra.mxu0 %v579
  %v638 = vpop.f32.mrf.mxu0
  %v639 = vadd.f32 0.0, %v638
  %640 = vdwg.mxu0
  %641 = vmatpush.msra.mxu0 0.0
  %642 = vmatpush.msra.mxu0 0.0
  %643 = vmatpush.msra.mxu0 0.0
  %644 = vmatpush.msra.mxu0 0.0
  %645 = vmatpush.msra.mxu0 0.0
  %646 = vmatpush.msra.mxu0 0.0
  %647 = vmatpush.msra.mxu0 0.0
  %648 = vmatpush.msra.mxu0 0.0
  %649 = vmatpush.msra.mxu0 0.0
  %650 = vmatpush.msra.mxu0 0.0
  %651 = vmatpush.msra.mxu0 0.0
  %652 = vmatpush.msra.mxu0 0.0
  %653 = vmatpush.msra.mxu0 0.0
  %654 = vmatpush.msra.mxu0 0.0
  %655 = vmatpush.msra.mxu0 0.0
  %656 = vmatpush.msra.mxu0 %v141
  %657 = vmatmul.f32.gmra.mxu0 %v579
  %v658 = vpop.f32.mrf.mxu0
  %v659 = vadd.f32 0.0, %v658
  %660 = vdwg.mxu0
  %v661 = vadd.f32 %v572, %v599
  %v662 = vadd.f32 %v573, %v619
  %v663 = vadd.f32 %v574, %v639
  %v664 = vadd.f32 %v575, %v659
  %665 = vrot.lane.b32.xlu0 %v138, 127
  %v666 = vpop.permute.xlu0 %665
  %667 = vrot.lane.b32.xlu0 %v139, 127
  %v668 = vpop.permute.xlu0 %667
  %669 = vrot.lane.b32.xlu0 %v140, 127
  %v670 = vpop.permute.xlu0 %669
  %671 = vrot.lane.b32.xlu0 %v141, 127
  %v672 = vpop.permute.xlu0 %671
  %vm673 = vcmp.lt.s32.totalorder %v151, 127
  %v674 = vsel %vm673, %v670, %v672
  %v675 = vsel %vm673, %v668, %v670
  %v676 = vsel %vm673, %v666, %v668
  %v677 = vsel %vm673, %v672, %v666
  %v678 = vperm.slane %v66, 5
  %v679 = vperm.slane %v67, 5
  %v680 = vperm.slane %v68, 5
  %v681 = vperm.slane %v69, 5
  %v682 = vmul.f32 %v676, %v678
  %v683 = vmul.f32 %v675, %v679
  %v684 = vmul.f32 %v674, %v680
  %v685 = vmul.f32 %v677, %v681
  %s686 = scalar_lea.vmem %s4, 40
  %v687 = vld [vmem:[%s686] sm:$0xff]
  %v689 = vsel %vm189, %v687, 0
  %691 = vmatpush.msra.mxu0 0.0
  %692 = vmatpush.msra.mxu0 0.0
  %693 = vmatpush.msra.mxu0 0.0
  %694 = vmatpush.msra.mxu0 0.0
  %695 = vmatpush.msra.mxu0 0.0
  %696 = vmatpush.msra.mxu0 0.0
  %697 = vmatpush.msra.mxu0 0.0
  %698 = vmatpush.msra.mxu0 0.0
  %699 = vmatpush.msra.mxu0 0.0
  %700 = vmatpush.msra.mxu0 0.0
  %701 = vmatpush.msra.mxu0 0.0
  %702 = vmatpush.msra.mxu0 0.0
  %703 = vmatpush.msra.mxu0 0.0
  %704 = vmatpush.msra.mxu0 0.0
  %705 = vmatpush.msra.mxu0 0.0
  %706 = vmatpush.msra.mxu0 %v682
  %707 = vmatmul.f32.gmra.mxu0 %v689
  %v708 = vpop.f32.mrf.mxu0
  %v709 = vadd.f32 0.0, %v708
  %710 = vdwg.mxu0
  %711 = vmatpush.msra.mxu0 0.0
  %712 = vmatpush.msra.mxu0 0.0
  %713 = vmatpush.msra.mxu0 0.0
  %714 = vmatpush.msra.mxu0 0.0
  %715 = vmatpush.msra.mxu0 0.0
  %716 = vmatpush.msra.mxu0 0.0
  %717 = vmatpush.msra.mxu0 0.0
  %718 = vmatpush.msra.mxu0 0.0
  %719 = vmatpush.msra.mxu0 0.0
  %720 = vmatpush.msra.mxu0 0.0
  %721 = vmatpush.msra.mxu0 0.0
  %722 = vmatpush.msra.mxu0 0.0
  %723 = vmatpush.msra.mxu0 0.0
  %724 = vmatpush.msra.mxu0 0.0
  %725 = vmatpush.msra.mxu0 0.0
  %726 = vmatpush.msra.mxu0 %v683
  %727 = vmatmul.f32.gmra.mxu0 %v689
  %v728 = vpop.f32.mrf.mxu0
  %v729 = vadd.f32 0.0, %v728
  %730 = vdwg.mxu0
  %731 = vmatpush.msra.mxu0 0.0
  %732 = vmatpush.msra.mxu0 0.0
  %733 = vmatpush.msra.mxu0 0.0
  %734 = vmatpush.msra.mxu0 0.0
  %735 = vmatpush.msra.mxu0 0.0
  %736 = vmatpush.msra.mxu0 0.0
  %737 = vmatpush.msra.mxu0 0.0
  %738 = vmatpush.msra.mxu0 0.0
  %739 = vmatpush.msra.mxu0 0.0
  %740 = vmatpush.msra.mxu0 0.0
  %741 = vmatpush.msra.mxu0 0.0
  %742 = vmatpush.msra.mxu0 0.0
  %743 = vmatpush.msra.mxu0 0.0
  %744 = vmatpush.msra.mxu0 0.0
  %745 = vmatpush.msra.mxu0 0.0
  %746 = vmatpush.msra.mxu0 %v684
  %747 = vmatmul.f32.gmra.mxu0 %v689
  %v748 = vpop.f32.mrf.mxu0
  %v749 = vadd.f32 0.0, %v748
  %750 = vdwg.mxu0
  %751 = vmatpush.msra.mxu0 0.0
  %752 = vmatpush.msra.mxu0 0.0
  %753 = vmatpush.msra.mxu0 0.0
  %754 = vmatpush.msra.mxu0 0.0
  %755 = vmatpush.msra.mxu0 0.0
  %756 = vmatpush.msra.mxu0 0.0
  %757 = vmatpush.msra.mxu0 0.0
  %758 = vmatpush.msra.mxu0 0.0
  %759 = vmatpush.msra.mxu0 0.0
  %760 = vmatpush.msra.mxu0 0.0
  %761 = vmatpush.msra.mxu0 0.0
  %762 = vmatpush.msra.mxu0 0.0
  %763 = vmatpush.msra.mxu0 0.0
  %764 = vmatpush.msra.mxu0 0.0
  %765 = vmatpush.msra.mxu0 0.0
  %766 = vmatpush.msra.mxu0 %v685
  %767 = vmatmul.f32.gmra.mxu0 %v689
  %v768 = vpop.f32.mrf.mxu0
  %v769 = vadd.f32 0.0, %v768
  %770 = vdwg.mxu0
  %v771 = vadd.f32 %v661, %v709
  %v772 = vadd.f32 %v662, %v729
  %v773 = vadd.f32 %v663, %v749
  %v774 = vadd.f32 %v664, %v769
  %775 = vrot.lane.b32.xlu0 %v138, 113
  %v776 = vpop.permute.xlu0 %775
  %777 = vrot.lane.b32.xlu0 %v139, 113
  %v778 = vpop.permute.xlu0 %777
  %779 = vrot.lane.b32.xlu0 %v140, 113
  %v780 = vpop.permute.xlu0 %779
  %781 = vrot.lane.b32.xlu0 %v141, 113
  %v782 = vpop.permute.xlu0 %781
  %vm783 = vcmp.lt.s32.totalorder %v151, 113
  %v784 = vsel %vm783, %v780, %v782
  %v785 = vsel %vm783, %v778, %v780
  %v786 = vsel %vm783, %v776, %v778
  %v787 = vsel %vm783, %v782, %v776
  %v788 = vperm.slane %v66, 6
  %v789 = vperm.slane %v67, 6
  %v790 = vperm.slane %v68, 6
  %v791 = vperm.slane %v69, 6
  %v792 = vmul.f32 %v786, %v788
  %v793 = vmul.f32 %v785, %v789
  %v794 = vmul.f32 %v784, %v790
  %v795 = vmul.f32 %v787, %v791
  %s796 = scalar_lea.vmem %s4, 48
  %v797 = vld [vmem:[%s796] sm:$0xff]
  %v799 = vsel %vm189, %v797, 0
  %801 = vmatpush.msra.mxu0 0.0
  %802 = vmatpush.msra.mxu0 0.0
  %803 = vmatpush.msra.mxu0 0.0
  %804 = vmatpush.msra.mxu0 0.0
  %805 = vmatpush.msra.mxu0 0.0
  %806 = vmatpush.msra.mxu0 0.0
  %807 = vmatpush.msra.mxu0 0.0
  %808 = vmatpush.msra.mxu0 0.0
  %809 = vmatpush.msra.mxu0 0.0
  %810 = vmatpush.msra.mxu0 0.0
  %811 = vmatpush.msra.mxu0 0.0
  %812 = vmatpush.msra.mxu0 0.0
  %813 = vmatpush.msra.mxu0 0.0
  %814 = vmatpush.msra.mxu0 0.0
  %815 = vmatpush.msra.mxu0 0.0
  %816 = vmatpush.msra.mxu0 %v792
  %817 = vmatmul.f32.gmra.mxu0 %v799
  %v818 = vpop.f32.mrf.mxu0
  %v819 = vadd.f32 0.0, %v818
  %820 = vdwg.mxu0
  %821 = vmatpush.msra.mxu0 0.0
  %822 = vmatpush.msra.mxu0 0.0
  %823 = vmatpush.msra.mxu0 0.0
  %824 = vmatpush.msra.mxu0 0.0
  %825 = vmatpush.msra.mxu0 0.0
  %826 = vmatpush.msra.mxu0 0.0
  %827 = vmatpush.msra.mxu0 0.0
  %828 = vmatpush.msra.mxu0 0.0
  %829 = vmatpush.msra.mxu0 0.0
  %830 = vmatpush.msra.mxu0 0.0
  %831 = vmatpush.msra.mxu0 0.0
  %832 = vmatpush.msra.mxu0 0.0
  %833 = vmatpush.msra.mxu0 0.0
  %834 = vmatpush.msra.mxu0 0.0
  %835 = vmatpush.msra.mxu0 0.0
  %836 = vmatpush.msra.mxu0 %v793
  %837 = vmatmul.f32.gmra.mxu0 %v799
  %v838 = vpop.f32.mrf.mxu0
  %v839 = vadd.f32 0.0, %v838
  %840 = vdwg.mxu0
  %841 = vmatpush.msra.mxu0 0.0
  %842 = vmatpush.msra.mxu0 0.0
  %843 = vmatpush.msra.mxu0 0.0
  %844 = vmatpush.msra.mxu0 0.0
  %845 = vmatpush.msra.mxu0 0.0
  %846 = vmatpush.msra.mxu0 0.0
  %847 = vmatpush.msra.mxu0 0.0
  %848 = vmatpush.msra.mxu0 0.0
  %849 = vmatpush.msra.mxu0 0.0
  %850 = vmatpush.msra.mxu0 0.0
  %851 = vmatpush.msra.mxu0 0.0
  %852 = vmatpush.msra.mxu0 0.0
  %853 = vmatpush.msra.mxu0 0.0
  %854 = vmatpush.msra.mxu0 0.0
  %855 = vmatpush.msra.mxu0 0.0
  %856 = vmatpush.msra.mxu0 %v794
  %857 = vmatmul.f32.gmra.mxu0 %v799
  %v858 = vpop.f32.mrf.mxu0
  %v859 = vadd.f32 0.0, %v858
  %860 = vdwg.mxu0
  %861 = vmatpush.msra.mxu0 0.0
  %862 = vmatpush.msra.mxu0 0.0
  %863 = vmatpush.msra.mxu0 0.0
  %864 = vmatpush.msra.mxu0 0.0
  %865 = vmatpush.msra.mxu0 0.0
  %866 = vmatpush.msra.mxu0 0.0
  %867 = vmatpush.msra.mxu0 0.0
  %868 = vmatpush.msra.mxu0 0.0
  %869 = vmatpush.msra.mxu0 0.0
  %870 = vmatpush.msra.mxu0 0.0
  %871 = vmatpush.msra.mxu0 0.0
  %872 = vmatpush.msra.mxu0 0.0
  %873 = vmatpush.msra.mxu0 0.0
  %874 = vmatpush.msra.mxu0 0.0
  %875 = vmatpush.msra.mxu0 0.0
  %876 = vmatpush.msra.mxu0 %v795
  %877 = vmatmul.f32.gmra.mxu0 %v799
  %v878 = vpop.f32.mrf.mxu0
  %v879 = vadd.f32 0.0, %v878
  %880 = vdwg.mxu0
  %v881 = vadd.f32 %v771, %v819
  %v882 = vadd.f32 %v772, %v839
  %v883 = vadd.f32 %v773, %v859
  %v884 = vadd.f32 %v774, %v879
  %885 = vrot.lane.b32.xlu0 %v138, 112
  %v886 = vpop.permute.xlu0 %885
  %887 = vrot.lane.b32.xlu0 %v139, 112
  %v888 = vpop.permute.xlu0 %887
  %889 = vrot.lane.b32.xlu0 %v140, 112
  %v890 = vpop.permute.xlu0 %889
  %891 = vrot.lane.b32.xlu0 %v141, 112
  %v892 = vpop.permute.xlu0 %891
  %vm893 = vcmp.lt.s32.totalorder %v151, 112
  %v894 = vsel %vm893, %v890, %v892
  %v895 = vsel %vm893, %v888, %v890
  %v896 = vsel %vm893, %v886, %v888
  %v897 = vsel %vm893, %v892, %v886
  %v898 = vperm.slane %v66, 7
  %v899 = vperm.slane %v67, 7
  %v900 = vperm.slane %v68, 7
  %v901 = vperm.slane %v69, 7
  %v902 = vmul.f32 %v896, %v898
  %v903 = vmul.f32 %v895, %v899
  %v904 = vmul.f32 %v894, %v900
  %v905 = vmul.f32 %v897, %v901
  %s906 = scalar_lea.vmem %s4, 56
  %v907 = vld [vmem:[%s906] sm:$0xff]
  %v909 = vsel %vm189, %v907, 0
  %911 = vmatpush.msra.mxu0 0.0
  %912 = vmatpush.msra.mxu0 0.0
  %913 = vmatpush.msra.mxu0 0.0
  %914 = vmatpush.msra.mxu0 0.0
  %915 = vmatpush.msra.mxu0 0.0
  %916 = vmatpush.msra.mxu0 0.0
  %917 = vmatpush.msra.mxu0 0.0
  %918 = vmatpush.msra.mxu0 0.0
  %919 = vmatpush.msra.mxu0 0.0
  %920 = vmatpush.msra.mxu0 0.0
  %921 = vmatpush.msra.mxu0 0.0
  %922 = vmatpush.msra.mxu0 0.0
  %923 = vmatpush.msra.mxu0 0.0
  %924 = vmatpush.msra.mxu0 0.0
  %925 = vmatpush.msra.mxu0 0.0
  %926 = vmatpush.msra.mxu0 %v902
  %927 = vmatmul.f32.gmra.mxu0 %v909
  %v928 = vpop.f32.mrf.mxu0
  %v929 = vadd.f32 0.0, %v928
  %930 = vdwg.mxu0
  %931 = vmatpush.msra.mxu0 0.0
  %932 = vmatpush.msra.mxu0 0.0
  %933 = vmatpush.msra.mxu0 0.0
  %934 = vmatpush.msra.mxu0 0.0
  %935 = vmatpush.msra.mxu0 0.0
  %936 = vmatpush.msra.mxu0 0.0
  %937 = vmatpush.msra.mxu0 0.0
  %938 = vmatpush.msra.mxu0 0.0
  %939 = vmatpush.msra.mxu0 0.0
  %940 = vmatpush.msra.mxu0 0.0
  %941 = vmatpush.msra.mxu0 0.0
  %942 = vmatpush.msra.mxu0 0.0
  %943 = vmatpush.msra.mxu0 0.0
  %944 = vmatpush.msra.mxu0 0.0
  %945 = vmatpush.msra.mxu0 0.0
  %946 = vmatpush.msra.mxu0 %v903
  %947 = vmatmul.f32.gmra.mxu0 %v909
  %v948 = vpop.f32.mrf.mxu0
  %v949 = vadd.f32 0.0, %v948
  %950 = vdwg.mxu0
  %951 = vmatpush.msra.mxu0 0.0
  %952 = vmatpush.msra.mxu0 0.0
  %953 = vmatpush.msra.mxu0 0.0
  %954 = vmatpush.msra.mxu0 0.0
  %955 = vmatpush.msra.mxu0 0.0
  %956 = vmatpush.msra.mxu0 0.0
  %957 = vmatpush.msra.mxu0 0.0
  %958 = vmatpush.msra.mxu0 0.0
  %959 = vmatpush.msra.mxu0 0.0
  %960 = vmatpush.msra.mxu0 0.0
  %961 = vmatpush.msra.mxu0 0.0
  %962 = vmatpush.msra.mxu0 0.0
  %963 = vmatpush.msra.mxu0 0.0
  %964 = vmatpush.msra.mxu0 0.0
  %965 = vmatpush.msra.mxu0 0.0
  %966 = vmatpush.msra.mxu0 %v904
  %967 = vmatmul.f32.gmra.mxu0 %v909
  %v968 = vpop.f32.mrf.mxu0
  %v969 = vadd.f32 0.0, %v968
  %970 = vdwg.mxu0
  %971 = vmatpush.msra.mxu0 0.0
  %972 = vmatpush.msra.mxu0 0.0
  %973 = vmatpush.msra.mxu0 0.0
  %974 = vmatpush.msra.mxu0 0.0
  %975 = vmatpush.msra.mxu0 0.0
  %976 = vmatpush.msra.mxu0 0.0
  %977 = vmatpush.msra.mxu0 0.0
  %978 = vmatpush.msra.mxu0 0.0
  %979 = vmatpush.msra.mxu0 0.0
  %980 = vmatpush.msra.mxu0 0.0
  %981 = vmatpush.msra.mxu0 0.0
  %982 = vmatpush.msra.mxu0 0.0
  %983 = vmatpush.msra.mxu0 0.0
  %984 = vmatpush.msra.mxu0 0.0
  %985 = vmatpush.msra.mxu0 0.0
  %986 = vmatpush.msra.mxu0 %v905
  %987 = vmatmul.f32.gmra.mxu0 %v909
  %v988 = vpop.f32.mrf.mxu0
  %v989 = vadd.f32 0.0, %v988
  %990 = vdwg.mxu0
  %v991 = vadd.f32 %v881, %v929
  %v992 = vadd.f32 %v882, %v949
  %v993 = vadd.f32 %v883, %v969
  %v994 = vadd.f32 %v884, %v989
  %995 = vrot.lane.b32.xlu0 %v138, 111
  %v996 = vpop.permute.xlu0 %995
  %997 = vrot.lane.b32.xlu0 %v139, 111
  %v998 = vpop.permute.xlu0 %997
  %999 = vrot.lane.b32.xlu0 %v140, 111
  %v1000 = vpop.permute.xlu0 %999
  %1001 = vrot.lane.b32.xlu0 %v141, 111
  %v1002 = vpop.permute.xlu0 %1001
  %vm1003 = vcmp.lt.s32.totalorder %v151, 111
  %v1004 = vsel %vm1003, %v1000, %v1002
  %v1005 = vsel %vm1003, %v998, %v1000
  %v1006 = vsel %vm1003, %v996, %v998
  %v1007 = vsel %vm1003, %v1002, %v996
  %v1008 = vperm.slane %v70, 0
  %v1009 = vperm.slane %v71, 0
  %v1010 = vperm.slane %v72, 0
  %v1011 = vperm.slane %v73, 0
  %v1012 = vmul.f32 %v1006, %v1008
  %v1013 = vmul.f32 %v1005, %v1009
  %v1014 = vmul.f32 %v1004, %v1010
  %v1015 = vmul.f32 %v1007, %v1011
  %s1016 = scalar_lea.vmem %s4, 64
  %v1017 = vld [vmem:[%s1016] sm:$0xff]
  %v1019 = vsel %vm189, %v1017, 0
  %1021 = vmatpush.msra.mxu0 0.0
  %1022 = vmatpush.msra.mxu0 0.0
  %1023 = vmatpush.msra.mxu0 0.0
  %1024 = vmatpush.msra.mxu0 0.0
  %1025 = vmatpush.msra.mxu0 0.0
  %1026 = vmatpush.msra.mxu0 0.0
  %1027 = vmatpush.msra.mxu0 0.0
  %1028 = vmatpush.msra.mxu0 0.0
  %1029 = vmatpush.msra.mxu0 0.0
  %1030 = vmatpush.msra.mxu0 0.0
  %1031 = vmatpush.msra.mxu0 0.0
  %1032 = vmatpush.msra.mxu0 0.0
  %1033 = vmatpush.msra.mxu0 0.0
  %1034 = vmatpush.msra.mxu0 0.0
  %1035 = vmatpush.msra.mxu0 0.0
  %1036 = vmatpush.msra.mxu0 %v1012
  %1037 = vmatmul.f32.gmra.mxu0 %v1019
  %v1038 = vpop.f32.mrf.mxu0
  %v1039 = vadd.f32 0.0, %v1038
  %1040 = vdwg.mxu0
  %1041 = vmatpush.msra.mxu0 0.0
  %1042 = vmatpush.msra.mxu0 0.0
  %1043 = vmatpush.msra.mxu0 0.0
  %1044 = vmatpush.msra.mxu0 0.0
  %1045 = vmatpush.msra.mxu0 0.0
  %1046 = vmatpush.msra.mxu0 0.0
  %1047 = vmatpush.msra.mxu0 0.0
  %1048 = vmatpush.msra.mxu0 0.0
  %1049 = vmatpush.msra.mxu0 0.0
  %1050 = vmatpush.msra.mxu0 0.0
  %1051 = vmatpush.msra.mxu0 0.0
  %1052 = vmatpush.msra.mxu0 0.0
  %1053 = vmatpush.msra.mxu0 0.0
  %1054 = vmatpush.msra.mxu0 0.0
  %1055 = vmatpush.msra.mxu0 0.0
  %1056 = vmatpush.msra.mxu0 %v1013
  %1057 = vmatmul.f32.gmra.mxu0 %v1019
  %v1058 = vpop.f32.mrf.mxu0
  %v1059 = vadd.f32 0.0, %v1058
  %1060 = vdwg.mxu0
  %1061 = vmatpush.msra.mxu0 0.0
  %1062 = vmatpush.msra.mxu0 0.0
  %1063 = vmatpush.msra.mxu0 0.0
  %1064 = vmatpush.msra.mxu0 0.0
  %1065 = vmatpush.msra.mxu0 0.0
  %1066 = vmatpush.msra.mxu0 0.0
  %1067 = vmatpush.msra.mxu0 0.0
  %1068 = vmatpush.msra.mxu0 0.0
  %1069 = vmatpush.msra.mxu0 0.0
  %1070 = vmatpush.msra.mxu0 0.0
  %1071 = vmatpush.msra.mxu0 0.0
  %1072 = vmatpush.msra.mxu0 0.0
  %1073 = vmatpush.msra.mxu0 0.0
  %1074 = vmatpush.msra.mxu0 0.0
  %1075 = vmatpush.msra.mxu0 0.0
  %1076 = vmatpush.msra.mxu0 %v1014
  %1077 = vmatmul.f32.gmra.mxu0 %v1019
  %v1078 = vpop.f32.mrf.mxu0
  %v1079 = vadd.f32 0.0, %v1078
  %1080 = vdwg.mxu0
  %1081 = vmatpush.msra.mxu0 0.0
  %1082 = vmatpush.msra.mxu0 0.0
  %1083 = vmatpush.msra.mxu0 0.0
  %1084 = vmatpush.msra.mxu0 0.0
  %1085 = vmatpush.msra.mxu0 0.0
  %1086 = vmatpush.msra.mxu0 0.0
  %1087 = vmatpush.msra.mxu0 0.0
  %1088 = vmatpush.msra.mxu0 0.0
  %1089 = vmatpush.msra.mxu0 0.0
  %1090 = vmatpush.msra.mxu0 0.0
  %1091 = vmatpush.msra.mxu0 0.0
  %1092 = vmatpush.msra.mxu0 0.0
  %1093 = vmatpush.msra.mxu0 0.0
  %1094 = vmatpush.msra.mxu0 0.0
  %1095 = vmatpush.msra.mxu0 0.0
  %1096 = vmatpush.msra.mxu0 %v1015
  %1097 = vmatmul.f32.gmra.mxu0 %v1019
  %v1098 = vpop.f32.mrf.mxu0
  %v1099 = vadd.f32 0.0, %v1098
  %1100 = vdwg.mxu0
  %v1101 = vadd.f32 %v991, %v1039
  %v1102 = vadd.f32 %v992, %v1059
  %v1103 = vadd.f32 %v993, %v1079
  %v1104 = vadd.f32 %v994, %v1099
  %v1105 = vld [vmem:[%s5] sm:$0xff]
  %1107 = vset.pattern.permute.xlu0 0
  %1108 = vperm.xlu0 %1107, %v1105
  %v1109 = vpop.permute.xlu0 %1108
  %v1111 = vadd.f32 %v1101, %v1109
  %v1112 = vadd.f32 %v1102, %v1109
  %v1113 = vadd.f32 %v1103, %v1109
  %v1114 = vadd.f32 %v1104, %v1109
  %1115 = vst [vmem:[#allocation2 + $0x20] sm:$0xff] %v1111
  %1116 = vst [vmem:[#allocation2 + $0x28] sm:$0xff] %v1112
  %1117 = vst [vmem:[#allocation2 + $0x30] sm:$0xff] %v1113
  %1118 = vst [vmem:[#allocation2 + $0x38] sm:$0xff] %v1114
  %v1119 = vld [vmem:[#allocation2] sm:$0xff]
  %v1120 = vld [vmem:[#allocation2 + $0x8] sm:$0xff]
  %v1121 = vld [vmem:[#allocation2 + $0x10] sm:$0xff]
  %v1122 = vld [vmem:[#allocation2 + $0x18] sm:$0xff]
  %v1123 = vld [vmem:[#allocation2 + $0x20] sm:$0xff]
  %v1124 = vld [vmem:[#allocation2 + $0x28] sm:$0xff]
  %v1125 = vld [vmem:[#allocation2 + $0x30] sm:$0xff]
  %v1126 = vld [vmem:[#allocation2 + $0x38] sm:$0xff]
  %v1127 = vadd.f32 %v1119, %v1120
  %v1128 = vadd.f32 %v1127, %v1121
  %v1129 = vadd.f32 %v1128, %v1122
  %1130 = vadd.xlane.f32.xlu0 %v1129
  %v1131 = vpop.xlane.xlu0 %1130
  %v1132 = vadd.f32 %v1123, %v1124
  %v1133 = vadd.f32 %v1132, %v1125
  %v1134 = vadd.f32 %v1133, %v1126
  %1135 = vadd.xlane.f32.xlu0 %v1134
  %v1136 = vpop.xlane.xlu0 %1135
  %v1137 = vmul.f32 %v1131, %v89
  %v1138 = vmul.f32 %v1136, %v89
  %v1139 = vmul.f32 %v1119, %v1119
  %v1140 = vmul.f32 %v1120, %v1120
  %v1141 = vmul.f32 %v1121, %v1121
  %v1142 = vmul.f32 %v1122, %v1122
  %v1143 = vmul.f32 %v1123, %v1123
  %v1144 = vmul.f32 %v1124, %v1124
  %v1145 = vmul.f32 %v1125, %v1125
  %v1146 = vmul.f32 %v1126, %v1126
  %v1147 = vadd.f32 %v1139, %v1140
  %v1148 = vadd.f32 %v1147, %v1141
  %v1149 = vadd.f32 %v1148, %v1142
  %1150 = vadd.xlane.f32.xlu0 %v1149
  %v1151 = vpop.xlane.xlu0 %1150
  %v1152 = vadd.f32 %v1143, %v1144
  %v1153 = vadd.f32 %v1152, %v1145
  %v1154 = vadd.f32 %v1153, %v1146
  %1155 = vadd.xlane.f32.xlu0 %v1154
  %v1156 = vpop.xlane.xlu0 %1155
  %v1157 = vmul.f32 %v1151, %v89
  %v1158 = vmul.f32 %v1156, %v89
  %v1159 = vmul.f32 %v1137, %v1137
  %v1160 = vmul.f32 %v1138, %v1138
  %v1161 = vsub.f32 %v1157, %v1159
  %v1162 = vsub.f32 %v1158, %v1160
  %v1163 = vmax.f32 %v1161, 0.0
  %v1164 = vmax.f32 %v1162, 0.0
  %v1165 = vld [vmem:[%s6] sm:$0xff]
  %v1166 = vld [vmem:[%s6 + $0x8] sm:$0xff]
  %v1167 = vadd.f32 %v1163, 1e-05
  %v1168 = vadd.f32 %v1164, 1e-05
  %v1169 = vrsqrt.pop %v1167
  %v1170 = vmul.f32 %v1169, %v1167
  %v1171 = vmul.f32 %v1170, %v1169
  %v1172 = vmul.f32 0.5, %v1171
  %v1173 = vsub.f32 1.5, %v1172
  %v1174 = vmul.f32 %v1169, %v1173
  %vm1175 = vweird.f32 %v1167
  %vm1176 = vweird.f32 %v1169
  %vm1177 = vmor %vm1175, %vm1176
  %v1178 = vsel %vm1177, %v1169, %v1174
  %v1179 = vrsqrt.pop %v1168
  %v1180 = vmul.f32 %v1179, %v1168
  %v1181 = vmul.f32 %v1180, %v1179
  %v1182 = vmul.f32 0.5, %v1181
  %v1183 = vsub.f32 1.5, %v1182
  %v1184 = vmul.f32 %v1179, %v1183
  %vm1185 = vweird.f32 %v1168
  %vm1186 = vweird.f32 %v1179
  %vm1187 = vmor %vm1185, %vm1186
  %v1188 = vsel %vm1187, %v1179, %v1184
  %v1189 = vmul.f32 %v1165, %v1178
  %v1190 = vmul.f32 %v1166, %v1188
  %v1191 = vld [vmem:[%s7] sm:$0xff]
  %v1192 = vld [vmem:[%s7 + $0x8] sm:$0xff]
  %v1193 = vmul.f32 %v1137, %v1189
  %v1194 = vmul.f32 %v1138, %v1190
  %v1195 = vsub.f32 %v1191, %v1193
  %v1196 = vsub.f32 %v1192, %v1194
  %1198 = vset.pattern.permute.xlu0 0
  %1199 = vperm.xlu0 %1198, %v1189
  %v1200 = vpop.permute.xlu0 %1199
  %1203 = vset.pattern.permute.xlu0 0
  %1204 = vperm.xlu0 %1203, %v1190
  %v1205 = vpop.permute.xlu0 %1204
  %v1207 = vmul.f32 %v1119, %v1200
  %v1208 = vmul.f32 %v1120, %v1200
  %v1209 = vmul.f32 %v1121, %v1200
  %v1210 = vmul.f32 %v1122, %v1200
  %v1211 = vmul.f32 %v1123, %v1205
  %v1212 = vmul.f32 %v1124, %v1205
  %v1213 = vmul.f32 %v1125, %v1205
  %v1214 = vmul.f32 %v1126, %v1205
  %1216 = vset.pattern.permute.xlu0 0
  %1217 = vperm.xlu0 %1216, %v1195
  %v1218 = vpop.permute.xlu0 %1217
  %1221 = vset.pattern.permute.xlu0 0
  %1222 = vperm.xlu0 %1221, %v1196
  %v1223 = vpop.permute.xlu0 %1222
  %v1225 = vadd.f32 %v1207, %v1218
  %v1226 = vadd.f32 %v1208, %v1218
  %v1227 = vadd.f32 %v1209, %v1218
  %v1228 = vadd.f32 %v1210, %v1218
  %v1229 = vadd.f32 %v1211, %v1223
  %v1230 = vadd.f32 %v1212, %v1223
  %v1231 = vadd.f32 %v1213, %v1223
  %v1232 = vadd.f32 %v1214, %v1223
  %v1233 = vmax.f32 %v1225, 0.0
  %v1234 = vmax.f32 %v1226, 0.0
  %v1235 = vmax.f32 %v1227, 0.0
  %v1236 = vmax.f32 %v1228, 0.0
  %v1237 = vmax.f32 %v1229, 0.0
  %v1238 = vmax.f32 %v1230, 0.0
  %v1239 = vmax.f32 %v1231, 0.0
  %v1240 = vmax.f32 %v1232, 0.0
  %1241 = vrot.lane.b32.xlu0 %v1233, 17
  %v1242 = vpop.permute.xlu0 %1241
  %1243 = vrot.lane.b32.xlu0 %v1237, 17
  %v1244 = vpop.permute.xlu0 %1243
  %1245 = vrot.lane.b32.xlu0 %v1234, 17
  %v1246 = vpop.permute.xlu0 %1245
  %1247 = vrot.lane.b32.xlu0 %v1238, 17
  %v1248 = vpop.permute.xlu0 %1247
  %1249 = vrot.lane.b32.xlu0 %v1235, 17
  %v1250 = vpop.permute.xlu0 %1249
  %1251 = vrot.lane.b32.xlu0 %v1239, 17
  %v1252 = vpop.permute.xlu0 %1251
  %1253 = vrot.lane.b32.xlu0 %v1236, 17
  %v1254 = vpop.permute.xlu0 %1253
  %1255 = vrot.lane.b32.xlu0 %v1240, 17
  %v1256 = vpop.permute.xlu0 %1255
  %v1257 = vsel %vm152, %v1250, %v1254
  %v1258 = vsel %vm152, %v1252, %v1256
  %v1259 = vsel %vm152, %v1246, %v1250
  %v1260 = vsel %vm152, %v1248, %v1252
  %v1261 = vsel %vm152, %v1242, %v1246
  %v1262 = vsel %vm152, %v1244, %v1248
  %v1263 = vsel %vm152, %v1254, %v1242
  %v1264 = vsel %vm152, %v1256, %v1244
  %v1265 = vmul.f32 %v1263, %v157
  %v1266 = vmul.f32 %v1261, %v158
  %v1267 = vmul.f32 %v1259, %v159
  %v1268 = vmul.f32 %v1257, %v160
  %v1269 = vmul.f32 %v1264, %v157
  %v1270 = vmul.f32 %v1262, %v158
  %v1271 = vmul.f32 %v1260, %v159
  %v1272 = vmul.f32 %v1258, %v160
  %v1273 = vld [vmem:[%s8] sm:$0xff]
  %1274 = vrot.lane.b32.xlu0 %v1233, 16
  %v1275 = vpop.permute.xlu0 %1274
  %1276 = vrot.lane.b32.xlu0 %v1237, 16
  %v1277 = vpop.permute.xlu0 %1276
  %1278 = vrot.lane.b32.xlu0 %v1234, 16
  %v1279 = vpop.permute.xlu0 %1278
  %1280 = vrot.lane.b32.xlu0 %v1238, 16
  %v1281 = vpop.permute.xlu0 %1280
  %1282 = vrot.lane.b32.xlu0 %v1235, 16
  %v1283 = vpop.permute.xlu0 %1282
  %1284 = vrot.lane.b32.xlu0 %v1239, 16
  %v1285 = vpop.permute.xlu0 %1284
  %1286 = vrot.lane.b32.xlu0 %v1236, 16
  %v1287 = vpop.permute.xlu0 %1286
  %1288 = vrot.lane.b32.xlu0 %v1240, 16
  %v1289 = vpop.permute.xlu0 %1288
  %v1290 = vsel %vm174, %v1283, %v1287
  %v1291 = vsel %vm174, %v1285, %v1289
  %v1292 = vsel %vm174, %v1279, %v1283
  %v1293 = vsel %vm174, %v1281, %v1285
  %v1294 = vsel %vm174, %v1275, %v1279
  %v1295 = vsel %vm174, %v1277, %v1281
  %v1296 = vsel %vm174, %v1287, %v1275
  %v1297 = vsel %vm174, %v1289, %v1277
  %v1298 = vmul.f32 %v1296, %v179
  %v1299 = vmul.f32 %v1294, %v180
  %v1300 = vmul.f32 %v1292, %v181
  %v1301 = vmul.f32 %v1290, %v182
  %v1302 = vmul.f32 %v1297, %v179
  %v1303 = vmul.f32 %v1295, %v180
  %v1304 = vmul.f32 %v1293, %v181
  %v1305 = vmul.f32 %v1291, %v182
  %s1306 = scalar_lea.vmem %s8, 8
  %v1307 = vld [vmem:[%s1306] sm:$0xff]
  %vm1308 = vcmask 130048
  %v1310 = vsel %vm1308, %v1307, 0
  %1312 = vmatpush.msra.mxu0 0.0
  %1313 = vmatpush.msra.mxu0 0.0
  %1314 = vmatpush.msra.mxu0 0.0
  %1315 = vmatpush.msra.mxu0 0.0
  %1316 = vmatpush.msra.mxu0 0.0
  %1317 = vmatpush.msra.mxu0 0.0
  %1318 = vmatpush.msra.mxu0 0.0
  %1319 = vmatpush.msra.mxu0 0.0
  %1320 = vmatpush.msra.mxu0 0.0
  %1321 = vmatpush.msra.mxu0 0.0
  %1322 = vmatpush.msra.mxu0 0.0
  %1323 = vmatpush.msra.mxu0 0.0
  %1324 = vmatpush.msra.mxu0 0.0
  %1325 = vmatpush.msra.mxu0 0.0
  %1326 = vmatpush.msra.mxu0 %v1302
  %1327 = vmatpush.msra.mxu0 %v1298
  %1328 = vmatmul.f32.gmra.mxu0 %v1310
  %v1329 = vpop.f32.mrf.mxu0
  %v1330 = vadd.f32 0.0, %v1329
  %1331 = vdwg.mxu0
  %1332 = vmatpush.msra.mxu0 0.0
  %1333 = vmatpush.msra.mxu0 0.0
  %1334 = vmatpush.msra.mxu0 0.0
  %1335 = vmatpush.msra.mxu0 0.0
  %1336 = vmatpush.msra.mxu0 0.0
  %1337 = vmatpush.msra.mxu0 0.0
  %1338 = vmatpush.msra.mxu0 0.0
  %1339 = vmatpush.msra.mxu0 0.0
  %1340 = vmatpush.msra.mxu0 0.0
  %1341 = vmatpush.msra.mxu0 0.0
  %1342 = vmatpush.msra.mxu0 0.0
  %1343 = vmatpush.msra.mxu0 0.0
  %1344 = vmatpush.msra.mxu0 0.0
  %1345 = vmatpush.msra.mxu0 0.0
  %1346 = vmatpush.msra.mxu0 %v1303
  %1347 = vmatpush.msra.mxu0 %v1299
  %1348 = vmatmul.f32.gmra.mxu0 %v1310
  %v1349 = vpop.f32.mrf.mxu0
  %v1350 = vadd.f32 0.0, %v1349
  %1351 = vdwg.mxu0
  %1352 = vmatpush.msra.mxu0 0.0
  %1353 = vmatpush.msra.mxu0 0.0
  %1354 = vmatpush.msra.mxu0 0.0
  %1355 = vmatpush.msra.mxu0 0.0
  %1356 = vmatpush.msra.mxu0 0.0
  %1357 = vmatpush.msra.mxu0 0.0
  %1358 = vmatpush.msra.mxu0 0.0
  %1359 = vmatpush.msra.mxu0 0.0
  %1360 = vmatpush.msra.mxu0 0.0
  %1361 = vmatpush.msra.mxu0 0.0
  %1362 = vmatpush.msra.mxu0 0.0
  %1363 = vmatpush.msra.mxu0 0.0
  %1364 = vmatpush.msra.mxu0 0.0
  %1365 = vmatpush.msra.mxu0 0.0
  %1366 = vmatpush.msra.mxu0 %v1304
  %1367 = vmatpush.msra.mxu0 %v1300
  %1368 = vmatmul.f32.gmra.mxu0 %v1310
  %v1369 = vpop.f32.mrf.mxu0
  %v1370 = vadd.f32 0.0, %v1369
  %1371 = vdwg.mxu0
  %1372 = vmatpush.msra.mxu0 0.0
  %1373 = vmatpush.msra.mxu0 0.0
  %1374 = vmatpush.msra.mxu0 0.0
  %1375 = vmatpush.msra.mxu0 0.0
  %1376 = vmatpush.msra.mxu0 0.0
  %1377 = vmatpush.msra.mxu0 0.0
  %1378 = vmatpush.msra.mxu0 0.0
  %1379 = vmatpush.msra.mxu0 0.0
  %1380 = vmatpush.msra.mxu0 0.0
  %1381 = vmatpush.msra.mxu0 0.0
  %1382 = vmatpush.msra.mxu0 0.0
  %1383 = vmatpush.msra.mxu0 0.0
  %1384 = vmatpush.msra.mxu0 0.0
  %1385 = vmatpush.msra.mxu0 0.0
  %1386 = vmatpush.msra.mxu0 %v1305
  %1387 = vmatpush.msra.mxu0 %v1301
  %1388 = vmatmul.f32.gmra.mxu0 %v1310
  %v1389 = vpop.f32.mrf.mxu0
  %v1390 = vadd.f32 0.0, %v1389
  %1391 = vdwg.mxu0
  %v1393 = vsel %vm1308, %v1273, 0
  %1395 = vmatpush.msra.mxu0 0.0
  %1396 = vmatpush.msra.mxu0 0.0
  %1397 = vmatpush.msra.mxu0 0.0
  %1398 = vmatpush.msra.mxu0 0.0
  %1399 = vmatpush.msra.mxu0 0.0
  %1400 = vmatpush.msra.mxu0 0.0
  %1401 = vmatpush.msra.mxu0 0.0
  %1402 = vmatpush.msra.mxu0 0.0
  %1403 = vmatpush.msra.mxu0 0.0
  %1404 = vmatpush.msra.mxu0 0.0
  %1405 = vmatpush.msra.mxu0 0.0
  %1406 = vmatpush.msra.mxu0 0.0
  %1407 = vmatpush.msra.mxu0 0.0
  %1408 = vmatpush.msra.mxu0 0.0
  %1409 = vmatpush.msra.mxu0 %v1269
  %1410 = vmatpush.msra.mxu0 %v1265
  %1411 = vmatmul.f32.gmra.mxu0 %v1393
  %v1412 = vpop.f32.mrf.mxu0
  %v1413 = vadd.f32 %v1330, %v1412
  %1414 = vdwg.mxu0
  %1415 = vmatpush.msra.mxu0 0.0
  %1416 = vmatpush.msra.mxu0 0.0
  %1417 = vmatpush.msra.mxu0 0.0
  %1418 = vmatpush.msra.mxu0 0.0
  %1419 = vmatpush.msra.mxu0 0.0
  %1420 = vmatpush.msra.mxu0 0.0
  %1421 = vmatpush.msra.mxu0 0.0
  %1422 = vmatpush.msra.mxu0 0.0
  %1423 = vmatpush.msra.mxu0 0.0
  %1424 = vmatpush.msra.mxu0 0.0
  %1425 = vmatpush.msra.mxu0 0.0
  %1426 = vmatpush.msra.mxu0 0.0
  %1427 = vmatpush.msra.mxu0 0.0
  %1428 = vmatpush.msra.mxu0 0.0
  %1429 = vmatpush.msra.mxu0 %v1270
  %1430 = vmatpush.msra.mxu0 %v1266
  %1431 = vmatmul.f32.gmra.mxu0 %v1393
  %v1432 = vpop.f32.mrf.mxu0
  %v1433 = vadd.f32 %v1350, %v1432
  %1434 = vdwg.mxu0
  %1435 = vmatpush.msra.mxu0 0.0
  %1436 = vmatpush.msra.mxu0 0.0
  %1437 = vmatpush.msra.mxu0 0.0
  %1438 = vmatpush.msra.mxu0 0.0
  %1439 = vmatpush.msra.mxu0 0.0
  %1440 = vmatpush.msra.mxu0 0.0
  %1441 = vmatpush.msra.mxu0 0.0
  %1442 = vmatpush.msra.mxu0 0.0
  %1443 = vmatpush.msra.mxu0 0.0
  %1444 = vmatpush.msra.mxu0 0.0
  %1445 = vmatpush.msra.mxu0 0.0
  %1446 = vmatpush.msra.mxu0 0.0
  %1447 = vmatpush.msra.mxu0 0.0
  %1448 = vmatpush.msra.mxu0 0.0
  %1449 = vmatpush.msra.mxu0 %v1271
  %1450 = vmatpush.msra.mxu0 %v1267
  %1451 = vmatmul.f32.gmra.mxu0 %v1393
  %v1452 = vpop.f32.mrf.mxu0
  %v1453 = vadd.f32 %v1370, %v1452
  %1454 = vdwg.mxu0
  %1455 = vmatpush.msra.mxu0 0.0
  %1456 = vmatpush.msra.mxu0 0.0
  %1457 = vmatpush.msra.mxu0 0.0
  %1458 = vmatpush.msra.mxu0 0.0
  %1459 = vmatpush.msra.mxu0 0.0
  %1460 = vmatpush.msra.mxu0 0.0
  %1461 = vmatpush.msra.mxu0 0.0
  %1462 = vmatpush.msra.mxu0 0.0
  %1463 = vmatpush.msra.mxu0 0.0
  %1464 = vmatpush.msra.mxu0 0.0
  %1465 = vmatpush.msra.mxu0 0.0
  %1466 = vmatpush.msra.mxu0 0.0
  %1467 = vmatpush.msra.mxu0 0.0
  %1468 = vmatpush.msra.mxu0 0.0
  %1469 = vmatpush.msra.mxu0 %v1272
  %1470 = vmatpush.msra.mxu0 %v1268
  %1471 = vmatmul.f32.gmra.mxu0 %v1393
  %v1472 = vpop.f32.mrf.mxu0
  %v1473 = vadd.f32 %v1390, %v1472
  %1474 = vdwg.mxu0
  %1475 = vrot.lane.b32.xlu0 %v1233, 15
  %v1476 = vpop.permute.xlu0 %1475
  %1477 = vrot.lane.b32.xlu0 %v1237, 15
  %v1478 = vpop.permute.xlu0 %1477
  %1479 = vrot.lane.b32.xlu0 %v1234, 15
  %v1480 = vpop.permute.xlu0 %1479
  %1481 = vrot.lane.b32.xlu0 %v1238, 15
  %v1482 = vpop.permute.xlu0 %1481
  %1483 = vrot.lane.b32.xlu0 %v1235, 15
  %v1484 = vpop.permute.xlu0 %1483
  %1485 = vrot.lane.b32.xlu0 %v1239, 15
  %v1486 = vpop.permute.xlu0 %1485
  %1487 = vrot.lane.b32.xlu0 %v1236, 15
  %v1488 = vpop.permute.xlu0 %1487
  %1489 = vrot.lane.b32.xlu0 %v1240, 15
  %v1490 = vpop.permute.xlu0 %1489
  %v1491 = vsel %vm364, %v1484, %v1488
  %v1492 = vsel %vm364, %v1486, %v1490
  %v1493 = vsel %vm364, %v1480, %v1484
  %v1494 = vsel %vm364, %v1482, %v1486
  %v1495 = vsel %vm364, %v1476, %v1480
  %v1496 = vsel %vm364, %v1478, %v1482
  %v1497 = vsel %vm364, %v1488, %v1476
  %v1498 = vsel %vm364, %v1490, %v1478
  %v1499 = vmul.f32 %v1497, %v369
  %v1500 = vmul.f32 %v1495, %v370
  %v1501 = vmul.f32 %v1493, %v371
  %v1502 = vmul.f32 %v1491, %v372
  %v1503 = vmul.f32 %v1498, %v369
  %v1504 = vmul.f32 %v1496, %v370
  %v1505 = vmul.f32 %v1494, %v371
  %v1506 = vmul.f32 %v1492, %v372
  %s1507 = scalar_lea.vmem %s8, 16
  %v1508 = vld [vmem:[%s1507] sm:$0xff]
  %v1510 = vsel %vm1308, %v1508, 0
  %1512 = vmatpush.msra.mxu0 0.0
  %1513 = vmatpush.msra.mxu0 0.0
  %1514 = vmatpush.msra.mxu0 0.0
  %1515 = vmatpush.msra.mxu0 0.0
  %1516 = vmatpush.msra.mxu0 0.0
  %1517 = vmatpush.msra.mxu0 0.0
  %1518 = vmatpush.msra.mxu0 0.0
  %1519 = vmatpush.msra.mxu0 0.0
  %1520 = vmatpush.msra.mxu0 0.0
  %1521 = vmatpush.msra.mxu0 0.0
  %1522 = vmatpush.msra.mxu0 0.0
  %1523 = vmatpush.msra.mxu0 0.0
  %1524 = vmatpush.msra.mxu0 0.0
  %1525 = vmatpush.msra.mxu0 0.0
  %1526 = vmatpush.msra.mxu0 %v1503
  %1527 = vmatpush.msra.mxu0 %v1499
  %1528 = vmatmul.f32.gmra.mxu0 %v1510
  %v1529 = vpop.f32.mrf.mxu0
  %v1530 = vadd.f32 0.0, %v1529
  %1531 = vdwg.mxu0
  %1532 = vmatpush.msra.mxu0 0.0
  %1533 = vmatpush.msra.mxu0 0.0
  %1534 = vmatpush.msra.mxu0 0.0
  %1535 = vmatpush.msra.mxu0 0.0
  %1536 = vmatpush.msra.mxu0 0.0
  %1537 = vmatpush.msra.mxu0 0.0
  %1538 = vmatpush.msra.mxu0 0.0
  %1539 = vmatpush.msra.mxu0 0.0
  %1540 = vmatpush.msra.mxu0 0.0
  %1541 = vmatpush.msra.mxu0 0.0
  %1542 = vmatpush.msra.mxu0 0.0
  %1543 = vmatpush.msra.mxu0 0.0
  %1544 = vmatpush.msra.mxu0 0.0
  %1545 = vmatpush.msra.mxu0 0.0
  %1546 = vmatpush.msra.mxu0 %v1504
  %1547 = vmatpush.msra.mxu0 %v1500
  %1548 = vmatmul.f32.gmra.mxu0 %v1510
  %v1549 = vpop.f32.mrf.mxu0
  %v1550 = vadd.f32 0.0, %v1549
  %1551 = vdwg.mxu0
  %1552 = vmatpush.msra.mxu0 0.0
  %1553 = vmatpush.msra.mxu0 0.0
  %1554 = vmatpush.msra.mxu0 0.0
  %1555 = vmatpush.msra.mxu0 0.0
  %1556 = vmatpush.msra.mxu0 0.0
  %1557 = vmatpush.msra.mxu0 0.0
  %1558 = vmatpush.msra.mxu0 0.0
  %1559 = vmatpush.msra.mxu0 0.0
  %1560 = vmatpush.msra.mxu0 0.0
  %1561 = vmatpush.msra.mxu0 0.0
  %1562 = vmatpush.msra.mxu0 0.0
  %1563 = vmatpush.msra.mxu0 0.0
  %1564 = vmatpush.msra.mxu0 0.0
  %1565 = vmatpush.msra.mxu0 0.0
  %1566 = vmatpush.msra.mxu0 %v1505
  %1567 = vmatpush.msra.mxu0 %v1501
  %1568 = vmatmul.f32.gmra.mxu0 %v1510
  %v1569 = vpop.f32.mrf.mxu0
  %v1570 = vadd.f32 0.0, %v1569
  %1571 = vdwg.mxu0
  %1572 = vmatpush.msra.mxu0 0.0
  %1573 = vmatpush.msra.mxu0 0.0
  %1574 = vmatpush.msra.mxu0 0.0
  %1575 = vmatpush.msra.mxu0 0.0
  %1576 = vmatpush.msra.mxu0 0.0
  %1577 = vmatpush.msra.mxu0 0.0
  %1578 = vmatpush.msra.mxu0 0.0
  %1579 = vmatpush.msra.mxu0 0.0
  %1580 = vmatpush.msra.mxu0 0.0
  %1581 = vmatpush.msra.mxu0 0.0
  %1582 = vmatpush.msra.mxu0 0.0
  %1583 = vmatpush.msra.mxu0 0.0
  %1584 = vmatpush.msra.mxu0 0.0
  %1585 = vmatpush.msra.mxu0 0.0
  %1586 = vmatpush.msra.mxu0 %v1506
  %1587 = vmatpush.msra.mxu0 %v1502
  %1588 = vmatmul.f32.gmra.mxu0 %v1510
  %v1589 = vpop.f32.mrf.mxu0
  %v1590 = vadd.f32 0.0, %v1589
  %1591 = vdwg.mxu0
  %v1592 = vadd.f32 %v1413, %v1530
  %v1593 = vadd.f32 %v1433, %v1550
  %v1594 = vadd.f32 %v1453, %v1570
  %v1595 = vadd.f32 %v1473, %v1590
  %1596 = vrot.lane.b32.xlu0 %v1233, 1
  %v1597 = vpop.permute.xlu0 %1596
  %1598 = vrot.lane.b32.xlu0 %v1237, 1
  %v1599 = vpop.permute.xlu0 %1598
  %1600 = vrot.lane.b32.xlu0 %v1234, 1
  %v1601 = vpop.permute.xlu0 %1600
  %1602 = vrot.lane.b32.xlu0 %v1238, 1
  %v1603 = vpop.permute.xlu0 %1602
  %1604 = vrot.lane.b32.xlu0 %v1235, 1
  %v1605 = vpop.permute.xlu0 %1604
  %1606 = vrot.lane.b32.xlu0 %v1239, 1
  %v1607 = vpop.permute.xlu0 %1606
  %1608 = vrot.lane.b32.xlu0 %v1236, 1
  %v1609 = vpop.permute.xlu0 %1608
  %1610 = vrot.lane.b32.xlu0 %v1240, 1
  %v1611 = vpop.permute.xlu0 %1610
  %v1612 = vsel %vm474, %v1605, %v1609
  %v1613 = vsel %vm474, %v1607, %v1611
  %v1614 = vsel %vm474, %v1601, %v1605
  %v1615 = vsel %vm474, %v1603, %v1607
  %v1616 = vsel %vm474, %v1597, %v1601
  %v1617 = vsel %vm474, %v1599, %v1603
  %v1618 = vsel %vm474, %v1609, %v1597
  %v1619 = vsel %vm474, %v1611, %v1599
  %v1620 = vmul.f32 %v1618, %v479
  %v1621 = vmul.f32 %v1616, %v480
  %v1622 = vmul.f32 %v1614, %v481
  %v1623 = vmul.f32 %v1612, %v482
  %v1624 = vmul.f32 %v1619, %v479
  %v1625 = vmul.f32 %v1617, %v480
  %v1626 = vmul.f32 %v1615, %v481
  %v1627 = vmul.f32 %v1613, %v482
  %s1628 = scalar_lea.vmem %s8, 24
  %v1629 = vld [vmem:[%s1628] sm:$0xff]
  %v1631 = vsel %vm1308, %v1629, 0
  %1633 = vmatpush.msra.mxu0 0.0
  %1634 = vmatpush.msra.mxu0 0.0
  %1635 = vmatpush.msra.mxu0 0.0
  %1636 = vmatpush.msra.mxu0 0.0
  %1637 = vmatpush.msra.mxu0 0.0
  %1638 = vmatpush.msra.mxu0 0.0
  %1639 = vmatpush.msra.mxu0 0.0
  %1640 = vmatpush.msra.mxu0 0.0
  %1641 = vmatpush.msra.mxu0 0.0
  %1642 = vmatpush.msra.mxu0 0.0
  %1643 = vmatpush.msra.mxu0 0.0
  %1644 = vmatpush.msra.mxu0 0.0
  %1645 = vmatpush.msra.mxu0 0.0
  %1646 = vmatpush.msra.mxu0 0.0
  %1647 = vmatpush.msra.mxu0 %v1624
  %1648 = vmatpush.msra.mxu0 %v1620
  %1649 = vmatmul.f32.gmra.mxu0 %v1631
  %v1650 = vpop.f32.mrf.mxu0
  %v1651 = vadd.f32 0.0, %v1650
  %1652 = vdwg.mxu0
  %1653 = vmatpush.msra.mxu0 0.0
  %1654 = vmatpush.msra.mxu0 0.0
  %1655 = vmatpush.msra.mxu0 0.0
  %1656 = vmatpush.msra.mxu0 0.0
  %1657 = vmatpush.msra.mxu0 0.0
  %1658 = vmatpush.msra.mxu0 0.0
  %1659 = vmatpush.msra.mxu0 0.0
  %1660 = vmatpush.msra.mxu0 0.0
  %1661 = vmatpush.msra.mxu0 0.0
  %1662 = vmatpush.msra.mxu0 0.0
  %1663 = vmatpush.msra.mxu0 0.0
  %1664 = vmatpush.msra.mxu0 0.0
  %1665 = vmatpush.msra.mxu0 0.0
  %1666 = vmatpush.msra.mxu0 0.0
  %1667 = vmatpush.msra.mxu0 %v1625
  %1668 = vmatpush.msra.mxu0 %v1621
  %1669 = vmatmul.f32.gmra.mxu0 %v1631
  %v1670 = vpop.f32.mrf.mxu0
  %v1671 = vadd.f32 0.0, %v1670
  %1672 = vdwg.mxu0
  %1673 = vmatpush.msra.mxu0 0.0
  %1674 = vmatpush.msra.mxu0 0.0
  %1675 = vmatpush.msra.mxu0 0.0
  %1676 = vmatpush.msra.mxu0 0.0
  %1677 = vmatpush.msra.mxu0 0.0
  %1678 = vmatpush.msra.mxu0 0.0
  %1679 = vmatpush.msra.mxu0 0.0
  %1680 = vmatpush.msra.mxu0 0.0
  %1681 = vmatpush.msra.mxu0 0.0
  %1682 = vmatpush.msra.mxu0 0.0
  %1683 = vmatpush.msra.mxu0 0.0
  %1684 = vmatpush.msra.mxu0 0.0
  %1685 = vmatpush.msra.mxu0 0.0
  %1686 = vmatpush.msra.mxu0 0.0
  %1687 = vmatpush.msra.mxu0 %v1626
  %1688 = vmatpush.msra.mxu0 %v1622
  %1689 = vmatmul.f32.gmra.mxu0 %v1631
  %v1690 = vpop.f32.mrf.mxu0
  %v1691 = vadd.f32 0.0, %v1690
  %1692 = vdwg.mxu0
  %1693 = vmatpush.msra.mxu0 0.0
  %1694 = vmatpush.msra.mxu0 0.0
  %1695 = vmatpush.msra.mxu0 0.0
  %1696 = vmatpush.msra.mxu0 0.0
  %1697 = vmatpush.msra.mxu0 0.0
  %1698 = vmatpush.msra.mxu0 0.0
  %1699 = vmatpush.msra.mxu0 0.0
  %1700 = vmatpush.msra.mxu0 0.0
  %1701 = vmatpush.msra.mxu0 0.0
  %1702 = vmatpush.msra.mxu0 0.0
  %1703 = vmatpush.msra.mxu0 0.0
  %1704 = vmatpush.msra.mxu0 0.0
  %1705 = vmatpush.msra.mxu0 0.0
  %1706 = vmatpush.msra.mxu0 0.0
  %1707 = vmatpush.msra.mxu0 %v1627
  %1708 = vmatpush.msra.mxu0 %v1623
  %1709 = vmatmul.f32.gmra.mxu0 %v1631
  %v1710 = vpop.f32.mrf.mxu0
  %v1711 = vadd.f32 0.0, %v1710
  %1712 = vdwg.mxu0
  %v1713 = vadd.f32 %v1592, %v1651
  %v1714 = vadd.f32 %v1593, %v1671
  %v1715 = vadd.f32 %v1594, %v1691
  %v1716 = vadd.f32 %v1595, %v1711
  %s1717 = scalar_lea.vmem %s8, 32
  %v1718 = vld [vmem:[%s1717] sm:$0xff]
  %v1720 = vsel %vm1308, %v1718, 0
  %1722 = vmatpush.msra.mxu0 0.0
  %1723 = vmatpush.msra.mxu0 0.0
  %1724 = vmatpush.msra.mxu0 0.0
  %1725 = vmatpush.msra.mxu0 0.0
  %1726 = vmatpush.msra.mxu0 0.0
  %1727 = vmatpush.msra.mxu0 0.0
  %1728 = vmatpush.msra.mxu0 0.0
  %1729 = vmatpush.msra.mxu0 0.0
  %1730 = vmatpush.msra.mxu0 0.0
  %1731 = vmatpush.msra.mxu0 0.0
  %1732 = vmatpush.msra.mxu0 0.0
  %1733 = vmatpush.msra.mxu0 0.0
  %1734 = vmatpush.msra.mxu0 0.0
  %1735 = vmatpush.msra.mxu0 0.0
  %1736 = vmatpush.msra.mxu0 %v1237
  %1737 = vmatpush.msra.mxu0 %v1233
  %1738 = vmatmul.f32.gmra.mxu0 %v1720
  %v1739 = vpop.f32.mrf.mxu0
  %v1740 = vadd.f32 0.0, %v1739
  %1741 = vdwg.mxu0
  %1742 = vmatpush.msra.mxu0 0.0
  %1743 = vmatpush.msra.mxu0 0.0
  %1744 = vmatpush.msra.mxu0 0.0
  %1745 = vmatpush.msra.mxu0 0.0
  %1746 = vmatpush.msra.mxu0 0.0
  %1747 = vmatpush.msra.mxu0 0.0
  %1748 = vmatpush.msra.mxu0 0.0
  %1749 = vmatpush.msra.mxu0 0.0
  %1750 = vmatpush.msra.mxu0 0.0
  %1751 = vmatpush.msra.mxu0 0.0
  %1752 = vmatpush.msra.mxu0 0.0
  %1753 = vmatpush.msra.mxu0 0.0
  %1754 = vmatpush.msra.mxu0 0.0
  %1755 = vmatpush.msra.mxu0 0.0
  %1756 = vmatpush.msra.mxu0 %v1238
  %1757 = vmatpush.msra.mxu0 %v1234
  %1758 = vmatmul.f32.gmra.mxu0 %v1720
  %v1759 = vpop.f32.mrf.mxu0
  %v1760 = vadd.f32 0.0, %v1759
  %1761 = vdwg.mxu0
  %1762 = vmatpush.msra.mxu0 0.0
  %1763 = vmatpush.msra.mxu0 0.0
  %1764 = vmatpush.msra.mxu0 0.0
  %1765 = vmatpush.msra.mxu0 0.0
  %1766 = vmatpush.msra.mxu0 0.0
  %1767 = vmatpush.msra.mxu0 0.0
  %1768 = vmatpush.msra.mxu0 0.0
  %1769 = vmatpush.msra.mxu0 0.0
  %1770 = vmatpush.msra.mxu0 0.0
  %1771 = vmatpush.msra.mxu0 0.0
  %1772 = vmatpush.msra.mxu0 0.0
  %1773 = vmatpush.msra.mxu0 0.0
  %1774 = vmatpush.msra.mxu0 0.0
  %1775 = vmatpush.msra.mxu0 0.0
  %1776 = vmatpush.msra.mxu0 %v1239
  %1777 = vmatpush.msra.mxu0 %v1235
  %1778 = vmatmul.f32.gmra.mxu0 %v1720
  %v1779 = vpop.f32.mrf.mxu0
  %v1780 = vadd.f32 0.0, %v1779
  %1781 = vdwg.mxu0
  %1782 = vmatpush.msra.mxu0 0.0
  %1783 = vmatpush.msra.mxu0 0.0
  %1784 = vmatpush.msra.mxu0 0.0
  %1785 = vmatpush.msra.mxu0 0.0
  %1786 = vmatpush.msra.mxu0 0.0
  %1787 = vmatpush.msra.mxu0 0.0
  %1788 = vmatpush.msra.mxu0 0.0
  %1789 = vmatpush.msra.mxu0 0.0
  %1790 = vmatpush.msra.mxu0 0.0
  %1791 = vmatpush.msra.mxu0 0.0
  %1792 = vmatpush.msra.mxu0 0.0
  %1793 = vmatpush.msra.mxu0 0.0
  %1794 = vmatpush.msra.mxu0 0.0
  %1795 = vmatpush.msra.mxu0 0.0
  %1796 = vmatpush.msra.mxu0 %v1240
  %1797 = vmatpush.msra.mxu0 %v1236
  %1798 = vmatmul.f32.gmra.mxu0 %v1720
  %v1799 = vpop.f32.mrf.mxu0
  %v1800 = vadd.f32 0.0, %v1799
  %1801 = vdwg.mxu0
  %v1802 = vadd.f32 %v1713, %v1740
  %v1803 = vadd.f32 %v1714, %v1760
  %v1804 = vadd.f32 %v1715, %v1780
  %v1805 = vadd.f32 %v1716, %v1800
  %1806 = vrot.lane.b32.xlu0 %v1233, 127
  %v1807 = vpop.permute.xlu0 %1806
  %1808 = vrot.lane.b32.xlu0 %v1237, 127
  %v1809 = vpop.permute.xlu0 %1808
  %1810 = vrot.lane.b32.xlu0 %v1234, 127
  %v1811 = vpop.permute.xlu0 %1810
  %1812 = vrot.lane.b32.xlu0 %v1238, 127
  %v1813 = vpop.permute.xlu0 %1812
  %1814 = vrot.lane.b32.xlu0 %v1235, 127
  %v1815 = vpop.permute.xlu0 %1814
  %1816 = vrot.lane.b32.xlu0 %v1239, 127
  %v1817 = vpop.permute.xlu0 %1816
  %1818 = vrot.lane.b32.xlu0 %v1236, 127
  %v1819 = vpop.permute.xlu0 %1818
  %1820 = vrot.lane.b32.xlu0 %v1240, 127
  %v1821 = vpop.permute.xlu0 %1820
  %v1822 = vsel %vm673, %v1815, %v1819
  %v1823 = vsel %vm673, %v1817, %v1821
  %v1824 = vsel %vm673, %v1811, %v1815
  %v1825 = vsel %vm673, %v1813, %v1817
  %v1826 = vsel %vm673, %v1807, %v1811
  %v1827 = vsel %vm673, %v1809, %v1813
  %v1828 = vsel %vm673, %v1819, %v1807
  %v1829 = vsel %vm673, %v1821, %v1809
  %v1830 = vmul.f32 %v1826, %v678
  %v1831 = vmul.f32 %v1824, %v679
  %v1832 = vmul.f32 %v1822, %v680
  %v1833 = vmul.f32 %v1828, %v681
  %v1834 = vmul.f32 %v1827, %v678
  %v1835 = vmul.f32 %v1825, %v679
  %v1836 = vmul.f32 %v1823, %v680
  %v1837 = vmul.f32 %v1829, %v681
  %s1838 = scalar_lea.vmem %s8, 40
  %v1839 = vld [vmem:[%s1838] sm:$0xff]
  %v1841 = vsel %vm1308, %v1839, 0
  %1843 = vmatpush.msra.mxu0 0.0
  %1844 = vmatpush.msra.mxu0 0.0
  %1845 = vmatpush.msra.mxu0 0.0
  %1846 = vmatpush.msra.mxu0 0.0
  %1847 = vmatpush.msra.mxu0 0.0
  %1848 = vmatpush.msra.mxu0 0.0
  %1849 = vmatpush.msra.mxu0 0.0
  %1850 = vmatpush.msra.mxu0 0.0
  %1851 = vmatpush.msra.mxu0 0.0
  %1852 = vmatpush.msra.mxu0 0.0
  %1853 = vmatpush.msra.mxu0 0.0
  %1854 = vmatpush.msra.mxu0 0.0
  %1855 = vmatpush.msra.mxu0 0.0
  %1856 = vmatpush.msra.mxu0 0.0
  %1857 = vmatpush.msra.mxu0 %v1834
  %1858 = vmatpush.msra.mxu0 %v1830
  %1859 = vmatmul.f32.gmra.mxu0 %v1841
  %v1860 = vpop.f32.mrf.mxu0
  %v1861 = vadd.f32 0.0, %v1860
  %1862 = vdwg.mxu0
  %1863 = vmatpush.msra.mxu0 0.0
  %1864 = vmatpush.msra.mxu0 0.0
  %1865 = vmatpush.msra.mxu0 0.0
  %1866 = vmatpush.msra.mxu0 0.0
  %1867 = vmatpush.msra.mxu0 0.0
  %1868 = vmatpush.msra.mxu0 0.0
  %1869 = vmatpush.msra.mxu0 0.0
  %1870 = vmatpush.msra.mxu0 0.0
  %1871 = vmatpush.msra.mxu0 0.0
  %1872 = vmatpush.msra.mxu0 0.0
  %1873 = vmatpush.msra.mxu0 0.0
  %1874 = vmatpush.msra.mxu0 0.0
  %1875 = vmatpush.msra.mxu0 0.0
  %1876 = vmatpush.msra.mxu0 0.0
  %1877 = vmatpush.msra.mxu0 %v1835
  %1878 = vmatpush.msra.mxu0 %v1831
  %1879 = vmatmul.f32.gmra.mxu0 %v1841
  %v1880 = vpop.f32.mrf.mxu0
  %v1881 = vadd.f32 0.0, %v1880
  %1882 = vdwg.mxu0
  %1883 = vmatpush.msra.mxu0 0.0
  %1884 = vmatpush.msra.mxu0 0.0
  %1885 = vmatpush.msra.mxu0 0.0
  %1886 = vmatpush.msra.mxu0 0.0
  %1887 = vmatpush.msra.mxu0 0.0
  %1888 = vmatpush.msra.mxu0 0.0
  %1889 = vmatpush.msra.mxu0 0.0
  %1890 = vmatpush.msra.mxu0 0.0
  %1891 = vmatpush.msra.mxu0 0.0
  %1892 = vmatpush.msra.mxu0 0.0
  %1893 = vmatpush.msra.mxu0 0.0
  %1894 = vmatpush.msra.mxu0 0.0
  %1895 = vmatpush.msra.mxu0 0.0
  %1896 = vmatpush.msra.mxu0 0.0
  %1897 = vmatpush.msra.mxu0 %v1836
  %1898 = vmatpush.msra.mxu0 %v1832
  %1899 = vmatmul.f32.gmra.mxu0 %v1841
  %v1900 = vpop.f32.mrf.mxu0
  %v1901 = vadd.f32 0.0, %v1900
  %1902 = vdwg.mxu0
  %1903 = vmatpush.msra.mxu0 0.0
  %1904 = vmatpush.msra.mxu0 0.0
  %1905 = vmatpush.msra.mxu0 0.0
  %1906 = vmatpush.msra.mxu0 0.0
  %1907 = vmatpush.msra.mxu0 0.0
  %1908 = vmatpush.msra.mxu0 0.0
  %1909 = vmatpush.msra.mxu0 0.0
  %1910 = vmatpush.msra.mxu0 0.0
  %1911 = vmatpush.msra.mxu0 0.0
  %1912 = vmatpush.msra.mxu0 0.0
  %1913 = vmatpush.msra.mxu0 0.0
  %1914 = vmatpush.msra.mxu0 0.0
  %1915 = vmatpush.msra.mxu0 0.0
  %1916 = vmatpush.msra.mxu0 0.0
  %1917 = vmatpush.msra.mxu0 %v1837
  %1918 = vmatpush.msra.mxu0 %v1833
  %1919 = vmatmul.f32.gmra.mxu0 %v1841
  %v1920 = vpop.f32.mrf.mxu0
  %v1921 = vadd.f32 0.0, %v1920
  %1922 = vdwg.mxu0
  %v1923 = vadd.f32 %v1802, %v1861
  %v1924 = vadd.f32 %v1803, %v1881
  %v1925 = vadd.f32 %v1804, %v1901
  %v1926 = vadd.f32 %v1805, %v1921
  %1927 = vrot.lane.b32.xlu0 %v1233, 113
  %v1928 = vpop.permute.xlu0 %1927
  %1929 = vrot.lane.b32.xlu0 %v1237, 113
  %v1930 = vpop.permute.xlu0 %1929
  %1931 = vrot.lane.b32.xlu0 %v1234, 113
  %v1932 = vpop.permute.xlu0 %1931
  %1933 = vrot.lane.b32.xlu0 %v1238, 113
  %v1934 = vpop.permute.xlu0 %1933
  %1935 = vrot.lane.b32.xlu0 %v1235, 113
  %v1936 = vpop.permute.xlu0 %1935
  %1937 = vrot.lane.b32.xlu0 %v1239, 113
  %v1938 = vpop.permute.xlu0 %1937
  %1939 = vrot.lane.b32.xlu0 %v1236, 113
  %v1940 = vpop.permute.xlu0 %1939
  %1941 = vrot.lane.b32.xlu0 %v1240, 113
  %v1942 = vpop.permute.xlu0 %1941
  %v1943 = vsel %vm783, %v1936, %v1940
  %v1944 = vsel %vm783, %v1938, %v1942
  %v1945 = vsel %vm783, %v1932, %v1936
  %v1946 = vsel %vm783, %v1934, %v1938
  %v1947 = vsel %vm783, %v1928, %v1932
  %v1948 = vsel %vm783, %v1930, %v1934
  %v1949 = vsel %vm783, %v1940, %v1928
  %v1950 = vsel %vm783, %v1942, %v1930
  %v1951 = vmul.f32 %v1947, %v788
  %v1952 = vmul.f32 %v1945, %v789
  %v1953 = vmul.f32 %v1943, %v790
  %v1954 = vmul.f32 %v1949, %v791
  %v1955 = vmul.f32 %v1948, %v788
  %v1956 = vmul.f32 %v1946, %v789
  %v1957 = vmul.f32 %v1944, %v790
  %v1958 = vmul.f32 %v1950, %v791
  %s1959 = scalar_lea.vmem %s8, 48
  %v1960 = vld [vmem:[%s1959] sm:$0xff]
  %v1962 = vsel %vm1308, %v1960, 0
  %1964 = vmatpush.msra.mxu0 0.0
  %1965 = vmatpush.msra.mxu0 0.0
  %1966 = vmatpush.msra.mxu0 0.0
  %1967 = vmatpush.msra.mxu0 0.0
  %1968 = vmatpush.msra.mxu0 0.0
  %1969 = vmatpush.msra.mxu0 0.0
  %1970 = vmatpush.msra.mxu0 0.0
  %1971 = vmatpush.msra.mxu0 0.0
  %1972 = vmatpush.msra.mxu0 0.0
  %1973 = vmatpush.msra.mxu0 0.0
  %1974 = vmatpush.msra.mxu0 0.0
  %1975 = vmatpush.msra.mxu0 0.0
  %1976 = vmatpush.msra.mxu0 0.0
  %1977 = vmatpush.msra.mxu0 0.0
  %1978 = vmatpush.msra.mxu0 %v1955
  %1979 = vmatpush.msra.mxu0 %v1951
  %1980 = vmatmul.f32.gmra.mxu0 %v1962
  %v1981 = vpop.f32.mrf.mxu0
  %v1982 = vadd.f32 0.0, %v1981
  %1983 = vdwg.mxu0
  %1984 = vmatpush.msra.mxu0 0.0
  %1985 = vmatpush.msra.mxu0 0.0
  %1986 = vmatpush.msra.mxu0 0.0
  %1987 = vmatpush.msra.mxu0 0.0
  %1988 = vmatpush.msra.mxu0 0.0
  %1989 = vmatpush.msra.mxu0 0.0
  %1990 = vmatpush.msra.mxu0 0.0
  %1991 = vmatpush.msra.mxu0 0.0
  %1992 = vmatpush.msra.mxu0 0.0
  %1993 = vmatpush.msra.mxu0 0.0
  %1994 = vmatpush.msra.mxu0 0.0
  %1995 = vmatpush.msra.mxu0 0.0
  %1996 = vmatpush.msra.mxu0 0.0
  %1997 = vmatpush.msra.mxu0 0.0
  %1998 = vmatpush.msra.mxu0 %v1956
  %1999 = vmatpush.msra.mxu0 %v1952
  %2000 = vmatmul.f32.gmra.mxu0 %v1962
  %v2001 = vpop.f32.mrf.mxu0
  %v2002 = vadd.f32 0.0, %v2001
  %2003 = vdwg.mxu0
  %2004 = vmatpush.msra.mxu0 0.0
  %2005 = vmatpush.msra.mxu0 0.0
  %2006 = vmatpush.msra.mxu0 0.0
  %2007 = vmatpush.msra.mxu0 0.0
  %2008 = vmatpush.msra.mxu0 0.0
  %2009 = vmatpush.msra.mxu0 0.0
  %2010 = vmatpush.msra.mxu0 0.0
  %2011 = vmatpush.msra.mxu0 0.0
  %2012 = vmatpush.msra.mxu0 0.0
  %2013 = vmatpush.msra.mxu0 0.0
  %2014 = vmatpush.msra.mxu0 0.0
  %2015 = vmatpush.msra.mxu0 0.0
  %2016 = vmatpush.msra.mxu0 0.0
  %2017 = vmatpush.msra.mxu0 0.0
  %2018 = vmatpush.msra.mxu0 %v1957
  %2019 = vmatpush.msra.mxu0 %v1953
  %2020 = vmatmul.f32.gmra.mxu0 %v1962
  %v2021 = vpop.f32.mrf.mxu0
  %v2022 = vadd.f32 0.0, %v2021
  %2023 = vdwg.mxu0
  %2024 = vmatpush.msra.mxu0 0.0
  %2025 = vmatpush.msra.mxu0 0.0
  %2026 = vmatpush.msra.mxu0 0.0
  %2027 = vmatpush.msra.mxu0 0.0
  %2028 = vmatpush.msra.mxu0 0.0
  %2029 = vmatpush.msra.mxu0 0.0
  %2030 = vmatpush.msra.mxu0 0.0
  %2031 = vmatpush.msra.mxu0 0.0
  %2032 = vmatpush.msra.mxu0 0.0
  %2033 = vmatpush.msra.mxu0 0.0
  %2034 = vmatpush.msra.mxu0 0.0
  %2035 = vmatpush.msra.mxu0 0.0
  %2036 = vmatpush.msra.mxu0 0.0
  %2037 = vmatpush.msra.mxu0 0.0
  %2038 = vmatpush.msra.mxu0 %v1958
  %2039 = vmatpush.msra.mxu0 %v1954
  %2040 = vmatmul.f32.gmra.mxu0 %v1962
  %v2041 = vpop.f32.mrf.mxu0
  %v2042 = vadd.f32 0.0, %v2041
  %2043 = vdwg.mxu0
  %v2044 = vadd.f32 %v1923, %v1982
  %v2045 = vadd.f32 %v1924, %v2002
  %v2046 = vadd.f32 %v1925, %v2022
  %v2047 = vadd.f32 %v1926, %v2042
  %2048 = vrot.lane.b32.xlu0 %v1233, 112
  %v2049 = vpop.permute.xlu0 %2048
  %2050 = vrot.lane.b32.xlu0 %v1237, 112
  %v2051 = vpop.permute.xlu0 %2050
  %2052 = vrot.lane.b32.xlu0 %v1234, 112
  %v2053 = vpop.permute.xlu0 %2052
  %2054 = vrot.lane.b32.xlu0 %v1238, 112
  %v2055 = vpop.permute.xlu0 %2054
  %2056 = vrot.lane.b32.xlu0 %v1235, 112
  %v2057 = vpop.permute.xlu0 %2056
  %2058 = vrot.lane.b32.xlu0 %v1239, 112
  %v2059 = vpop.permute.xlu0 %2058
  %2060 = vrot.lane.b32.xlu0 %v1236, 112
  %v2061 = vpop.permute.xlu0 %2060
  %2062 = vrot.lane.b32.xlu0 %v1240, 112
  %v2063 = vpop.permute.xlu0 %2062
  %v2064 = vsel %vm893, %v2057, %v2061
  %v2065 = vsel %vm893, %v2059, %v2063
  %v2066 = vsel %vm893, %v2053, %v2057
  %v2067 = vsel %vm893, %v2055, %v2059
  %v2068 = vsel %vm893, %v2049, %v2053
  %v2069 = vsel %vm893, %v2051, %v2055
  %v2070 = vsel %vm893, %v2061, %v2049
  %v2071 = vsel %vm893, %v2063, %v2051
  %v2072 = vmul.f32 %v2068, %v898
  %v2073 = vmul.f32 %v2066, %v899
  %v2074 = vmul.f32 %v2064, %v900
  %v2075 = vmul.f32 %v2070, %v901
  %v2076 = vmul.f32 %v2069, %v898
  %v2077 = vmul.f32 %v2067, %v899
  %v2078 = vmul.f32 %v2065, %v900
  %v2079 = vmul.f32 %v2071, %v901
  %s2080 = scalar_lea.vmem %s8, 56
  %v2081 = vld [vmem:[%s2080] sm:$0xff]
  %v2083 = vsel %vm1308, %v2081, 0
  %2085 = vmatpush.msra.mxu0 0.0
  %2086 = vmatpush.msra.mxu0 0.0
  %2087 = vmatpush.msra.mxu0 0.0
  %2088 = vmatpush.msra.mxu0 0.0
  %2089 = vmatpush.msra.mxu0 0.0
  %2090 = vmatpush.msra.mxu0 0.0
  %2091 = vmatpush.msra.mxu0 0.0
  %2092 = vmatpush.msra.mxu0 0.0
  %2093 = vmatpush.msra.mxu0 0.0
  %2094 = vmatpush.msra.mxu0 0.0
  %2095 = vmatpush.msra.mxu0 0.0
  %2096 = vmatpush.msra.mxu0 0.0
  %2097 = vmatpush.msra.mxu0 0.0
  %2098 = vmatpush.msra.mxu0 0.0
  %2099 = vmatpush.msra.mxu0 %v2076
  %2100 = vmatpush.msra.mxu0 %v2072
  %2101 = vmatmul.f32.gmra.mxu0 %v2083
  %v2102 = vpop.f32.mrf.mxu0
  %v2103 = vadd.f32 0.0, %v2102
  %2104 = vdwg.mxu0
  %2105 = vmatpush.msra.mxu0 0.0
  %2106 = vmatpush.msra.mxu0 0.0
  %2107 = vmatpush.msra.mxu0 0.0
  %2108 = vmatpush.msra.mxu0 0.0
  %2109 = vmatpush.msra.mxu0 0.0
  %2110 = vmatpush.msra.mxu0 0.0
  %2111 = vmatpush.msra.mxu0 0.0
  %2112 = vmatpush.msra.mxu0 0.0
  %2113 = vmatpush.msra.mxu0 0.0
  %2114 = vmatpush.msra.mxu0 0.0
  %2115 = vmatpush.msra.mxu0 0.0
  %2116 = vmatpush.msra.mxu0 0.0
  %2117 = vmatpush.msra.mxu0 0.0
  %2118 = vmatpush.msra.mxu0 0.0
  %2119 = vmatpush.msra.mxu0 %v2077
  %2120 = vmatpush.msra.mxu0 %v2073
  %2121 = vmatmul.f32.gmra.mxu0 %v2083
  %v2122 = vpop.f32.mrf.mxu0
  %v2123 = vadd.f32 0.0, %v2122
  %2124 = vdwg.mxu0
  %2125 = vmatpush.msra.mxu0 0.0
  %2126 = vmatpush.msra.mxu0 0.0
  %2127 = vmatpush.msra.mxu0 0.0
  %2128 = vmatpush.msra.mxu0 0.0
  %2129 = vmatpush.msra.mxu0 0.0
  %2130 = vmatpush.msra.mxu0 0.0
  %2131 = vmatpush.msra.mxu0 0.0
  %2132 = vmatpush.msra.mxu0 0.0
  %2133 = vmatpush.msra.mxu0 0.0
  %2134 = vmatpush.msra.mxu0 0.0
  %2135 = vmatpush.msra.mxu0 0.0
  %2136 = vmatpush.msra.mxu0 0.0
  %2137 = vmatpush.msra.mxu0 0.0
  %2138 = vmatpush.msra.mxu0 0.0
  %2139 = vmatpush.msra.mxu0 %v2078
  %2140 = vmatpush.msra.mxu0 %v2074
  %2141 = vmatmul.f32.gmra.mxu0 %v2083
  %v2142 = vpop.f32.mrf.mxu0
  %v2143 = vadd.f32 0.0, %v2142
  %2144 = vdwg.mxu0
  %2145 = vmatpush.msra.mxu0 0.0
  %2146 = vmatpush.msra.mxu0 0.0
  %2147 = vmatpush.msra.mxu0 0.0
  %2148 = vmatpush.msra.mxu0 0.0
  %2149 = vmatpush.msra.mxu0 0.0
  %2150 = vmatpush.msra.mxu0 0.0
  %2151 = vmatpush.msra.mxu0 0.0
  %2152 = vmatpush.msra.mxu0 0.0
  %2153 = vmatpush.msra.mxu0 0.0
  %2154 = vmatpush.msra.mxu0 0.0
  %2155 = vmatpush.msra.mxu0 0.0
  %2156 = vmatpush.msra.mxu0 0.0
  %2157 = vmatpush.msra.mxu0 0.0
  %2158 = vmatpush.msra.mxu0 0.0
  %2159 = vmatpush.msra.mxu0 %v2079
  %2160 = vmatpush.msra.mxu0 %v2075
  %2161 = vmatmul.f32.gmra.mxu0 %v2083
  %v2162 = vpop.f32.mrf.mxu0
  %v2163 = vadd.f32 0.0, %v2162
  %2164 = vdwg.mxu0
  %v2165 = vadd.f32 %v2044, %v2103
  %v2166 = vadd.f32 %v2045, %v2123
  %v2167 = vadd.f32 %v2046, %v2143
  %v2168 = vadd.f32 %v2047, %v2163
  %2169 = vrot.lane.b32.xlu0 %v1233, 111
  %v2170 = vpop.permute.xlu0 %2169
  %2171 = vrot.lane.b32.xlu0 %v1237, 111
  %v2172 = vpop.permute.xlu0 %2171
  %2173 = vrot.lane.b32.xlu0 %v1234, 111
  %v2174 = vpop.permute.xlu0 %2173
  %2175 = vrot.lane.b32.xlu0 %v1238, 111
  %v2176 = vpop.permute.xlu0 %2175
  %2177 = vrot.lane.b32.xlu0 %v1235, 111
  %v2178 = vpop.permute.xlu0 %2177
  %2179 = vrot.lane.b32.xlu0 %v1239, 111
  %v2180 = vpop.permute.xlu0 %2179
  %2181 = vrot.lane.b32.xlu0 %v1236, 111
  %v2182 = vpop.permute.xlu0 %2181
  %2183 = vrot.lane.b32.xlu0 %v1240, 111
  %v2184 = vpop.permute.xlu0 %2183
  %v2185 = vsel %vm1003, %v2178, %v2182
  %v2186 = vsel %vm1003, %v2180, %v2184
  %v2187 = vsel %vm1003, %v2174, %v2178
  %v2188 = vsel %vm1003, %v2176, %v2180
  %v2189 = vsel %vm1003, %v2170, %v2174
  %v2190 = vsel %vm1003, %v2172, %v2176
  %v2191 = vsel %vm1003, %v2182, %v2170
  %v2192 = vsel %vm1003, %v2184, %v2172
  %v2193 = vmul.f32 %v2189, %v1008
  %v2194 = vmul.f32 %v2187, %v1009
  %v2195 = vmul.f32 %v2185, %v1010
  %v2196 = vmul.f32 %v2191, %v1011
  %v2197 = vmul.f32 %v2190, %v1008
  %v2198 = vmul.f32 %v2188, %v1009
  %v2199 = vmul.f32 %v2186, %v1010
  %v2200 = vmul.f32 %v2192, %v1011
  %s2201 = scalar_lea.vmem %s8, 64
  %v2202 = vld [vmem:[%s2201] sm:$0xff]
  %v2204 = vsel %vm1308, %v2202, 0
  %2206 = vmatpush.msra.mxu0 0.0
  %2207 = vmatpush.msra.mxu0 0.0
  %2208 = vmatpush.msra.mxu0 0.0
  %2209 = vmatpush.msra.mxu0 0.0
  %2210 = vmatpush.msra.mxu0 0.0
  %2211 = vmatpush.msra.mxu0 0.0
  %2212 = vmatpush.msra.mxu0 0.0
  %2213 = vmatpush.msra.mxu0 0.0
  %2214 = vmatpush.msra.mxu0 0.0
  %2215 = vmatpush.msra.mxu0 0.0
  %2216 = vmatpush.msra.mxu0 0.0
  %2217 = vmatpush.msra.mxu0 0.0
  %2218 = vmatpush.msra.mxu0 0.0
  %2219 = vmatpush.msra.mxu0 0.0
  %2220 = vmatpush.msra.mxu0 %v2197
  %2221 = vmatpush.msra.mxu0 %v2193
  %2222 = vmatmul.f32.gmra.mxu0 %v2204
  %v2223 = vpop.f32.mrf.mxu0
  %v2224 = vadd.f32 0.0, %v2223
  %2225 = vdwg.mxu0
  %2226 = vmatpush.msra.mxu0 0.0
  %2227 = vmatpush.msra.mxu0 0.0
  %2228 = vmatpush.msra.mxu0 0.0
  %2229 = vmatpush.msra.mxu0 0.0
  %2230 = vmatpush.msra.mxu0 0.0
  %2231 = vmatpush.msra.mxu0 0.0
  %2232 = vmatpush.msra.mxu0 0.0
  %2233 = vmatpush.msra.mxu0 0.0
  %2234 = vmatpush.msra.mxu0 0.0
  %2235 = vmatpush.msra.mxu0 0.0
  %2236 = vmatpush.msra.mxu0 0.0
  %2237 = vmatpush.msra.mxu0 0.0
  %2238 = vmatpush.msra.mxu0 0.0
  %2239 = vmatpush.msra.mxu0 0.0
  %2240 = vmatpush.msra.mxu0 %v2198
  %2241 = vmatpush.msra.mxu0 %v2194
  %2242 = vmatmul.f32.gmra.mxu0 %v2204
  %v2243 = vpop.f32.mrf.mxu0
  %v2244 = vadd.f32 0.0, %v2243
  %2245 = vdwg.mxu0
  %2246 = vmatpush.msra.mxu0 0.0
  %2247 = vmatpush.msra.mxu0 0.0
  %2248 = vmatpush.msra.mxu0 0.0
  %2249 = vmatpush.msra.mxu0 0.0
  %2250 = vmatpush.msra.mxu0 0.0
  %2251 = vmatpush.msra.mxu0 0.0
  %2252 = vmatpush.msra.mxu0 0.0
  %2253 = vmatpush.msra.mxu0 0.0
  %2254 = vmatpush.msra.mxu0 0.0
  %2255 = vmatpush.msra.mxu0 0.0
  %2256 = vmatpush.msra.mxu0 0.0
  %2257 = vmatpush.msra.mxu0 0.0
  %2258 = vmatpush.msra.mxu0 0.0
  %2259 = vmatpush.msra.mxu0 0.0
  %2260 = vmatpush.msra.mxu0 %v2199
  %2261 = vmatpush.msra.mxu0 %v2195
  %2262 = vmatmul.f32.gmra.mxu0 %v2204
  %v2263 = vpop.f32.mrf.mxu0
  %v2264 = vadd.f32 0.0, %v2263
  %2265 = vdwg.mxu0
  %2266 = vmatpush.msra.mxu0 0.0
  %2267 = vmatpush.msra.mxu0 0.0
  %2268 = vmatpush.msra.mxu0 0.0
  %2269 = vmatpush.msra.mxu0 0.0
  %2270 = vmatpush.msra.mxu0 0.0
  %2271 = vmatpush.msra.mxu0 0.0
  %2272 = vmatpush.msra.mxu0 0.0
  %2273 = vmatpush.msra.mxu0 0.0
  %2274 = vmatpush.msra.mxu0 0.0
  %2275 = vmatpush.msra.mxu0 0.0
  %2276 = vmatpush.msra.mxu0 0.0
  %2277 = vmatpush.msra.mxu0 0.0
  %2278 = vmatpush.msra.mxu0 0.0
  %2279 = vmatpush.msra.mxu0 0.0
  %2280 = vmatpush.msra.mxu0 %v2200
  %2281 = vmatpush.msra.mxu0 %v2196
  %2282 = vmatmul.f32.gmra.mxu0 %v2204
  %v2283 = vpop.f32.mrf.mxu0
  %v2284 = vadd.f32 0.0, %v2283
  %2285 = vdwg.mxu0
  %v2286 = vadd.f32 %v2165, %v2224
  %v2287 = vadd.f32 %v2166, %v2244
  %v2288 = vadd.f32 %v2167, %v2264
  %v2289 = vadd.f32 %v2168, %v2284
  %v2290 = vld [vmem:[%s9] sm:$0xff]
  %2292 = vset.pattern.permute.xlu0 0
  %2293 = vperm.xlu0 %2292, %v2290
  %v2294 = vpop.permute.xlu0 %2293
  %v2296 = vadd.f32 %v2286, %v2294
  %v2297 = vadd.f32 %v2287, %v2294
  %v2298 = vadd.f32 %v2288, %v2294
  %v2299 = vadd.f32 %v2289, %v2294
  %2300 = vst [vmem:[#allocation2 + $0x40] sm:$0xff] %v2296
  %2301 = vst [vmem:[#allocation2 + $0x48] sm:$0xff] %v2297
  %2302 = vst [vmem:[#allocation2 + $0x50] sm:$0xff] %v2298
  %2303 = vst [vmem:[#allocation2 + $0x58] sm:$0xff] %v2299
  %v2304 = vld [vmem:[#allocation2] sm:$0xf]
  %v2305 = vld [vmem:[#allocation2 + $0x8] sm:$0xf]
  %v2306 = vld [vmem:[#allocation2 + $0x10] sm:$0xf]
  %v2307 = vld [vmem:[#allocation2 + $0x18] sm:$0xf]
  %2308 = vst [vmem:[%s10] sm:$0xf] %v2304
  %2309 = vst [vmem:[%s10 + $0x8] sm:$0xf] %v2305
  %2310 = vst [vmem:[%s10 + $0x10] sm:$0xf] %v2306
  %2311 = vst [vmem:[%s10 + $0x18] sm:$0xf] %v2307
  %v2312 = vld [vmem:[#allocation2 + $0x20] sm:$0xff]
  %v2313 = vld [vmem:[#allocation2 + $0x28] sm:$0xff]
  %v2314 = vld [vmem:[#allocation2 + $0x30] sm:$0xff]
  %v2315 = vld [vmem:[#allocation2 + $0x38] sm:$0xff]
  %v2320 = vrot.slane %v2312, 4
  %v2321 = vrot.slane %v2313, 4
  %v2322 = vrot.slane %v2314, 4
  %v2323 = vrot.slane %v2315, 4
  %2328 = vst [vmem:[%s10] sm:$0xf0] %v2320
  %2329 = vst [vmem:[%s10 + $0x8] sm:$0xf0] %v2321
  %2330 = vst [vmem:[%s10 + $0x10] sm:$0xf0] %v2322
  %2331 = vst [vmem:[%s10 + $0x18] sm:$0xf0] %v2323
  %2332 = vst [vmem:[%s10 + $0x20] sm:$0xf] %v2320
  %2333 = vst [vmem:[%s10 + $0x28] sm:$0xf] %v2321
  %2334 = vst [vmem:[%s10 + $0x30] sm:$0xf] %v2322
  %2335 = vst [vmem:[%s10 + $0x38] sm:$0xf] %v2323
  %v2336 = vld [vmem:[#allocation2 + $0x40] sm:$0xff]
  %v2337 = vld [vmem:[#allocation2 + $0x48] sm:$0xff]
  %v2338 = vld [vmem:[#allocation2 + $0x50] sm:$0xff]
  %v2339 = vld [vmem:[#allocation2 + $0x58] sm:$0xff]
  %v2344 = vrot.slane %v2336, 4
  %v2345 = vrot.slane %v2337, 4
  %v2346 = vrot.slane %v2338, 4
  %v2347 = vrot.slane %v2339, 4
  %2352 = vst [vmem:[%s10 + $0x20] sm:$0xf0] %v2344
  %2353 = vst [vmem:[%s10 + $0x28] sm:$0xf0] %v2345
  %2354 = vst [vmem:[%s10 + $0x30] sm:$0xf0] %v2346
  %2355 = vst [vmem:[%s10 + $0x38] sm:$0xf0] %v2347
  %2356 = vst [vmem:[%s10 + $0x40] sm:$0xf] %v2344
  %2357 = vst [vmem:[%s10 + $0x48] sm:$0xf] %v2345
  %2358 = vst [vmem:[%s10 + $0x50] sm:$0xf] %v2346
  %2359 = vst [vmem:[%s10 + $0x58] sm:$0xf] %v2347
  // Predicated region
  $region42: #{dense_block_forward.1} parent=0 // pred_check
    _
  $region43: #{dense_block_forward.1} parent=0 // pred_check_branch
    %2361 = sbr.rel (0) target = $region45
  $region44: #{dense_block_forward.1} parent=0 // pred_region
    _
  $region45: #{dense_block_forward.1} parent=0 // pred_fallthru
    _
  // Predicated region
  $region46: #{dense_block_forward.1} parent=0 // pred_check
    _
  $region47: #{dense_block_forward.1} parent=0 // pred_check_branch
    %2363 = sbr.rel (0) target = $region49
  $region48: #{dense_block_forward.1} parent=0 // pred_region
    _
  $region49: #{dense_block_forward.1} parent=0 // pred_fallthru
    _

</llo_original>
